<compile_context>
chip_gen: v7x
topology: tpu7x:2x2x1
jax: 0.10.0
libtpu: 0.0.40
codegen_flags: <defaults>
</compile_context>

<pallas_src>
import functools

import numpy as np

import jax
import jax.numpy as jnp
from jax import lax
from jax.experimental import pallas as pl
from jax.experimental.pallas import tpu as pltpu


# --------------------------- in-kernel helpers ------------------------------

def _conv3x3_bn_relu(h, w_ref, b_ref, *, NB, H, W, P, mxu_dtype):
    """3x3 'same' conv (stride 1) + folded-BN bias + ReLU.

    h:      (NB, H, W, P) float32 activations (post-ReLU of previous stage).
    w_ref:  (3, 3P, P) ref; w_ref[ky] is the (kx, cin)-ordered K-slice for the
            vertical tap ky (ky=0 reads input row y-1, ky=2 reads row y+1).
    Only the 3 x-shifts are materialized (bf16, in registers); the 3 y-shifts
    are row-offset lhs slices into 3 accumulated MXU matmuls (K = 3P each).
    """
    f32 = jnp.float32
    hb = h.astype(mxu_dtype)                              # cast once (1x volume)

    if W > 1:
        zc = jnp.zeros((NB, H, 1, P), mxu_dtype)
        h_xm = jnp.concatenate([zc, hb[:, :, :W - 1, :]], axis=2)   # h[., x-1]
        h_xp = jnp.concatenate([hb[:, :, 1:, :], zc], axis=2)       # h[., x+1]
    else:
        h_xm = jnp.zeros_like(hb)
        h_xp = jnp.zeros_like(hb)
    # (NB, H, W, 3P): kx=0 block (x-1), kx=1 block (x), kx=2 block (x+1)
    patch = jnp.concatenate([h_xm, hb, h_xp], axis=3)

    # ky=1 (center row): full-height matmul.
    acc = jnp.dot(patch.reshape(NB * H * W, 3 * P), w_ref[1],
                  preferred_element_type=f32).reshape(NB, H, W, P)

    if H > 1:
        rows = NB * (H - 1) * W
        # ky=0: out[:, 1:] uses input rows [0, H-1)
        top = jnp.dot(patch[:, :H - 1].reshape(rows, 3 * P), w_ref[0],
                      preferred_element_type=f32).reshape(NB, H - 1, W, P)
        # ky=2: out[:, :H-1] uses input rows [1, H)
        bot = jnp.dot(patch[:, 1:].reshape(rows, 3 * P), w_ref[2],
                      preferred_element_type=f32).reshape(NB, H - 1, W, P)
        zr = jnp.zeros((NB, 1, W, P), f32)
        acc = (acc
               + jnp.concatenate([zr, top], axis=1)
               + jnp.concatenate([bot, zr], axis=1))

    bias = b_ref[...].reshape(1, 1, 1, P)
    return jnp.maximum(acc + bias, 0.0)


# ------------------------------- kernel -------------------------------------

def bottleneck_kernel(x_ref,
                      w1_ref, b1_ref, w2_ref, b2_ref,
                      w3_ref, b3_ref, w4_ref, b4_ref,
                      o_ref,
                      *, NB, H, W, Cin, P, mxu_dtype, lane_dense):
    f32 = jnp.float32
    Cout = w4_ref.shape[1]
    rows = NB * H * W

    x = x_ref[...]                          # (NB, H, W, Cin), float32
    xf = x.reshape(rows, Cin)               # free major-dim collapse

    # conv1: 1x1 (BN scale folded into w1) + bias + ReLU  (one MXU matmul)
    h1 = jnp.dot(xf.astype(mxu_dtype), w1_ref[...], preferred_element_type=f32)
    h1 = jnp.maximum(h1 + b1_ref[...], 0.0).reshape(NB, H, W, P)

    # conv2 / conv3: 3x3 same + BN + ReLU (3 accumulated K=3P matmuls each)
    h2 = _conv3x3_bn_relu(h1, w2_ref, b2_ref, NB=NB, H=H, W=W, P=P,
                          mxu_dtype=mxu_dtype)
    h3 = _conv3x3_bn_relu(h2, w3_ref, b3_ref, NB=NB, H=H, W=W, P=P,
                          mxu_dtype=mxu_dtype)

    # conv4: 1x1 + BN (no ReLU)
    h4 = jnp.dot(h3.reshape(rows, P).astype(mxu_dtype), w4_ref[...],
                 preferred_element_type=f32)
    h4 = h4 + b4_ref[...]

    # residual add (downsample is None -> identity = x, kept in f32) + ReLU
    out = jnp.maximum(h4 + xf, 0.0)

    if lane_dense:
        # lane-dense store (minor dim W*Cout): only used for small Cout.
        o_ref[...] = out.reshape(NB, H, W * Cout).astype(o_ref.dtype)
    else:
        o_ref[...] = out.reshape(NB, H, W, Cout).astype(o_ref.dtype)


# ------------------------------- wrapper -------------------------------------

def _vmem_capacity_bytes():
    try:
        return int(pltpu.get_tpu_info().vmem_capacity_bytes)
    except Exception:
        return 64 * 2 ** 20     # conservative (v7x per-core VMEM)


def _per_image_bytes(H, W, Cin, P, Cout, out_dtype):
    """Rough per-image VMEM footprint of one grid step (activations only)."""
    out_b = np.dtype(out_dtype).itemsize
    return int(H * W * (Cin * 4          # f32 x tile (also the residual)
                        + 3 * P * 2      # bf16 x-shift patch (3x duplication)
                        + 8 * P * 4      # f32 intermediates / matmul results
                        + Cout * 4       # f32 pre-store result
                        + Cout * out_b)) # output tile


def _pick_block_n(N, per_image_bytes, budget_bytes):
    """Largest batch tile that fits and still leaves a multi-step grid."""
    fits = [nb for nb in range(1, N + 1)
            if N % nb == 0 and nb * per_image_bytes <= budget_bytes]
    if not fits:
        return 1
    for min_steps in (4, 2, 1):   # prefer >=4 pipelined steps, then >=2 (megacore)
        cand = [nb for nb in fits if N // nb >= min_steps]
        if cand:
            return max(cand)
    return 1


def bottleneck_forward(x_nhwc, params, *, block_n=None,
                       mxu_dtype=jnp.bfloat16, out_dtype=jnp.bfloat16,
                       lane_dense_out=None):
    """Fused Bottleneck forward.  x_nhwc is float32 NHWC; returns out_dtype NHWC."""
    N, H, W, Cin = x_nhwc.shape
    P = params["w1f"].shape[1]
    Cout = params["w4f"].shape[1]
    assert Cout == Cin, "downsample=None requires inplanes == planes*expansion"
    assert params["w2f"].shape == (9 * P, P) and params["w3f"].shape == (9 * P, P)

    vmem_cap = _vmem_capacity_bytes()
    per_img = _per_image_bytes(H, W, Cin, P, Cout, out_dtype)
    NB = _pick_block_n(N, per_img, vmem_cap // 3) if block_n is None else block_n
    assert N % NB == 0

    weight_bytes = 2 * (Cin * P + 2 * 9 * P * P + P * Cout) + 4 * (3 * P + Cout)
    vmem_limit = int(min(max(4 * (NB * per_img + weight_bytes), 32 * 2 ** 20),
                         vmem_cap // 2))

    mx = lambda a: a.astype(mxu_dtype)
    # 3x3 weights passed pre-split per vertical tap: (3, 3P, P), rows (kx, cin).
    w_args = (mx(params["w1f"]), params["b1"],
              mx(params["w2f"]).reshape(3, 3 * P, P), params["b2"],
              mx(params["w3f"]).reshape(3, 3 * P, P), params["b3"],
              mx(params["w4f"]), params["b4"])

    def fullspec(shape):
        nd = len(shape)
        return pl.BlockSpec(shape, lambda n, _nd=nd: (0,) * _nd)

    def call(lane_dense):
        kernel = functools.partial(
            bottleneck_kernel, NB=NB, H=H, W=W, Cin=Cin, P=P,
            mxu_dtype=mxu_dtype, lane_dense=lane_dense)

        in_specs = [pl.BlockSpec((NB, H, W, Cin), lambda n: (n, 0, 0, 0))]
        for w in w_args:
            in_specs.append(fullspec(w.shape))

        if lane_dense:
            out_shape = jax.ShapeDtypeStruct((N, H, W * Cout), out_dtype)
            out_spec = pl.BlockSpec((NB, H, W * Cout), lambda n: (n, 0, 0))
        else:
            out_shape = jax.ShapeDtypeStruct((N, H, W, Cout), out_dtype)
            out_spec = pl.BlockSpec((NB, H, W, Cout), lambda n: (n, 0, 0, 0))

        out = pl.pallas_call(
            kernel,
            out_shape=out_shape,
            grid_spec=pltpu.PrefetchScalarGridSpec(
                num_scalar_prefetch=0,
                grid=(N // NB,),
                in_specs=in_specs,
                out_specs=out_spec),
            compiler_params=pltpu.CompilerParams(
                dimension_semantics=("parallel",),
                vmem_limit_bytes=vmem_limit),
        )(x_nhwc, *w_args)
        if lane_dense:
            out = out.reshape(N, H, W, Cout)
        return out

    if lane_dense_out is None:
        # auto: lane-dense store only pays off when Cout itself is not
        # 128-lane aligned; fall back in-wrapper if Mosaic rejects the merge.
        if (Cout % 128 != 0) and ((W * Cout) % 128 == 0):
            try:
                return jax.block_until_ready(call(True))
            except Exception:
                pass
        return call(False)

    if lane_dense_out and (W * Cout) % 128 != 0:
        lane_dense_out = False
    return call(bool(lane_dense_out))


# ----------------------- parameter construction ----------------------------

def _bn_scale_bias(key, c, eps=1e-5):
    """Deterministic inference-mode BN params folded to per-channel scale/bias."""
    kg, kb, km, kv = jax.random.split(key, 4)
    gamma = 1.0 + 0.1 * jax.random.normal(kg, (c,), jnp.float32)
    beta = 0.1 * jax.random.normal(kb, (c,), jnp.float32)
    mean = 0.1 * jax.random.normal(km, (c,), jnp.float32)
    var = 1.0 + 0.1 * jax.random.uniform(kv, (c,), jnp.float32)
    scale = gamma / jnp.sqrt(var + eps)
    bias = beta - mean * scale
    return scale, bias


def make_params(key, inplanes, planes, expansion=4):
    ks = jax.random.split(key, 8)
    outp = planes * expansion
    w1 = 0.1 * jax.random.normal(ks[0], (inplanes, planes), jnp.float32)
    w2 = 0.1 * jax.random.normal(ks[1], (3, 3, planes, planes), jnp.float32)
    w3 = 0.1 * jax.random.normal(ks[2], (3, 3, planes, planes), jnp.float32)
    w4 = 0.1 * jax.random.normal(ks[3], (planes, outp), jnp.float32)
    s1, b1 = _bn_scale_bias(ks[4], planes)
    s2, b2 = _bn_scale_bias(ks[5], planes)
    s3, b3 = _bn_scale_bias(ks[6], planes)
    s4, b4 = _bn_scale_bias(ks[7], outp)
    # Fold BN scale into the conv weights (per output channel); the kernel then
    # only adds a bias after each matmul.  w2f/w3f rows ordered (ky, kx, cin).
    return {
        "w1f": w1 * s1[None, :],
        "w2f": (w2 * s2[None, None, None, :]).reshape(9 * planes, planes),
        "w3f": (w3 * s3[None, None, None, :]).reshape(9 * planes, planes),
        "w4f": w4 * s4[None, :],
        "b1": b1.reshape(1, -1), "b2": b2.reshape(1, -1),
        "b3": b3.reshape(1, -1), "b4": b4.reshape(1, -1),
    }


# ----------------------- pure-JAX reference --------------------------------

def reference_forward(x_nhwc, params, *, round_dtype=None):
    """lax.conv reference.  If round_dtype is given, conv input activations and
    weights are rounded to it first (mirroring the kernel's bf16 MXU inputs);
    accumulation stays f32, the residual add uses full-precision x."""
    P = params["b1"].shape[1]
    Cin = params["w1f"].shape[0]
    Cout = params["w4f"].shape[1]

    def q(a):
        if round_dtype is None:
            return a.astype(jnp.float32)
        return a.astype(round_dtype).astype(jnp.float32)

    def conv_bn(h, w_hwio, bias, relu, pad):
        y = lax.conv_general_dilated(
            q(h), q(w_hwio), window_strides=(1, 1),
            padding=[(pad, pad), (pad, pad)],
            dimension_numbers=("NHWC", "HWIO", "NHWC"),
            precision=lax.Precision.HIGHEST)
        y = y + bias.reshape(1, 1, 1, -1)
        return jnp.maximum(y, 0.0) if relu else y

    h = conv_bn(x_nhwc, params["w1f"].reshape(1, 1, Cin, P), params["b1"], True, 0)
    h = conv_bn(h, params["w2f"].reshape(3, 3, P, P), params["b2"], True, 1)
    h = conv_bn(h, params["w3f"].reshape(3, 3, P, P), params["b3"], True, 1)
    h = conv_bn(h, params["w4f"].reshape(1, 1, P, Cout), params["b4"], False, 0)
    return jnp.maximum(h + x_nhwc.astype(jnp.float32), 0.0)


if __name__ == "__main__":
    # Small shapes: batch=2, inplanes=16, planes=4 (expansion=4 -> out=16),
    # spatial=8x8.  stride=1, downsample=None -> straight residual add.
    N, inplanes, planes, H, W = 2, 16, 4, 8, 8

    key = jax.random.PRNGKey(0)
    kx, kp = jax.random.split(key)
    x_nchw = jax.random.normal(kx, (N, inplanes, H, W), jnp.float32)  # PyTorch layout
    params = make_params(kp, inplanes, planes)

    x_nhwc = jnp.transpose(x_nchw, (0, 2, 3, 1))   # NCHW -> NHWC for the kernel

    out = bottleneck_forward(x_nhwc, params)       # bf16 NHWC
    out = jax.block_until_ready(out)
    out_f32 = out.astype(jnp.float32)

    out_nchw = jnp.transpose(out_f32, (0, 3, 1, 2))
    assert out_nchw.shape == (N, inplanes, H, W)

    # Tight check: reference with the same bf16 rounding of conv inputs/weights,
    # result rounded to the kernel's bf16 output dtype.
    ref_t = reference_forward(x_nhwc, params, round_dtype=jnp.bfloat16)
    ref_t_b = ref_t.astype(jnp.bfloat16).astype(jnp.float32)
    err_tight = float(jnp.max(jnp.abs(out_f32 - ref_t_b)))
    assert jnp.allclose(out_f32, ref_t_b, atol=2e-2, rtol=2e-2), err_tight

    # Loose sanity check vs. full-f32 module semantics.
    ref_f = reference_forward(x_nhwc, params)
    err_loose = float(jnp.max(jnp.abs(out_f32 - ref_f)))
    assert jnp.allclose(out_f32, ref_f, atol=1e-1, rtol=5e-2), err_loose

    print("KERNEL_OK")
</pallas_src>

<mosaic_0001>
module attributes {stable_mosaic.version = 11 : i64} {
  func.func @bottleneck_kernel(%arg0: i32, %arg1: memref<1x8x8x16xf32, #tpu.memory_space<vmem>>, %arg2: memref<16x4xbf16, #tpu.memory_space<vmem>>, %arg3: memref<1x4xf32, #tpu.memory_space<vmem>>, %arg4: memref<3x12x4xbf16, #tpu.memory_space<vmem>>, %arg5: memref<1x4xf32, #tpu.memory_space<vmem>>, %arg6: memref<3x12x4xbf16, #tpu.memory_space<vmem>>, %arg7: memref<1x4xf32, #tpu.memory_space<vmem>>, %arg8: memref<4x16xbf16, #tpu.memory_space<vmem>>, %arg9: memref<1x16xf32, #tpu.memory_space<vmem>>, %arg10: memref<1x8x128xbf16, #tpu.memory_space<vmem>>) attributes {dimension_semantics = [#tpu.dimension_semantics<parallel>], iteration_bounds = array<i64: 2>, scalar_prefetch = 0 : i64, scratch_operands = 0 : i64, tpu.core_type = #tpu.core_type<tc>, window_params = [{transform_indices = @transform_0, window_bounds = array<i64: 1, 8, 8, 16>}, {pipeline_mode = #tpu.pipeline_mode<synchronous>, transform_indices = @transform_1, window_bounds = array<i64: 16, 4>}, {pipeline_mode = #tpu.pipeline_mode<synchronous>, transform_indices = @transform_2, window_bounds = array<i64: 1, 4>}, {pipeline_mode = #tpu.pipeline_mode<synchronous>, transform_indices = @transform_3, window_bounds = array<i64: 3, 12, 4>}, {pipeline_mode = #tpu.pipeline_mode<synchronous>, transform_indices = @transform_4, window_bounds = array<i64: 1, 4>}, {pipeline_mode = #tpu.pipeline_mode<synchronous>, transform_indices = @transform_5, window_bounds = array<i64: 3, 12, 4>}, {pipeline_mode = #tpu.pipeline_mode<synchronous>, transform_indices = @transform_6, window_bounds = array<i64: 1, 4>}, {pipeline_mode = #tpu.pipeline_mode<synchronous>, transform_indices = @transform_7, window_bounds = array<i64: 4, 16>}, {pipeline_mode = #tpu.pipeline_mode<synchronous>, transform_indices = @transform_8, window_bounds = array<i64: 1, 16>}, {transform_indices = @transform_9, window_bounds = array<i64: 1, 8, 128>}]} {
    %c0 = arith.constant 0 : index
    %c0_0 = arith.constant 0 : index
    %c0_1 = arith.constant 0 : index
    %c0_2 = arith.constant 0 : index
    %0 = vector.load %arg1[%c0, %c0_0, %c0_1, %c0_2] : memref<1x8x8x16xf32, #tpu.memory_space<vmem>>, vector<1x8x8x16xf32>
    %1 = vector.shape_cast %0 : vector<1x8x8x16xf32> to vector<64x16xf32>
    %2 = arith.truncf %1 : vector<64x16xf32> to vector<64x16xbf16>
    %c0_3 = arith.constant 0 : index
    %c0_4 = arith.constant 0 : index
    %3 = vector.load %arg2[%c0_3, %c0_4] : memref<16x4xbf16, #tpu.memory_space<vmem>>, vector<16x4xbf16>
    %cst = arith.constant dense<0.000000e+00> : vector<64x4xf32>
    %4 = tpu.matmul %2, %3, %cst {dimension_numbers = #tpu.dot_dimension_numbers<[1], [0], [0], [1], [0, 0, 1, 1], [], []>} : vector<64x16xbf16>, vector<16x4xbf16>, vector<64x4xf32> -> vector<64x4xf32>
    %c0_5 = arith.constant 0 : index
    %c0_6 = arith.constant 0 : index
    %5 = vector.load %arg3[%c0_5, %c0_6] : memref<1x4xf32, #tpu.memory_space<vmem>>, vector<1x4xf32>
    %6 = vector.broadcast %5 : vector<1x4xf32> to vector<64x4xf32>
    %7 = arith.addf %4, %6 : vector<64x4xf32>
    %cst_7 = arith.constant 0.000000e+00 : f32
    %8 = vector.broadcast %cst_7 : f32 to vector<64x4xf32>
    %9 = arith.maximumf %7, %8 : vector<64x4xf32>
    %10 = vector.shape_cast %9 : vector<64x4xf32> to vector<1x8x8x4xf32>
    %11 = arith.truncf %10 : vector<1x8x8x4xf32> to vector<1x8x8x4xbf16>
    %cst_8 = arith.constant 0.000000e+00 : bf16
    %12 = vector.broadcast %cst_8 : bf16 to vector<1x8x1x4xbf16>
    %13 = vector.extract_strided_slice %11 {offsets = [0, 0, 0, 0], sizes = [1, 8, 7, 4], strides = [1, 1, 1, 1]} : vector<1x8x8x4xbf16> to vector<1x8x7x4xbf16>
    %14 = tpu.concatenate %12, %13 in 2 : vector<1x8x1x4xbf16>, vector<1x8x7x4xbf16> -> vector<1x8x8x4xbf16>
    %15 = vector.extract_strided_slice %11 {offsets = [0, 0, 1, 0], sizes = [1, 8, 7, 4], strides = [1, 1, 1, 1]} : vector<1x8x8x4xbf16> to vector<1x8x7x4xbf16>
    %16 = tpu.concatenate %15, %12 in 2 : vector<1x8x7x4xbf16>, vector<1x8x1x4xbf16> -> vector<1x8x8x4xbf16>
    %17 = tpu.concatenate %14, %11, %16 in 3 : vector<1x8x8x4xbf16>, vector<1x8x8x4xbf16>, vector<1x8x8x4xbf16> -> vector<1x8x8x12xbf16>
    %18 = vector.shape_cast %17 : vector<1x8x8x12xbf16> to vector<64x12xbf16>
    %c1 = arith.constant 1 : index
    %c0_9 = arith.constant 0 : index
    %c0_10 = arith.constant 0 : index
    %19 = vector.load %arg4[%c1, %c0_9, %c0_10] : memref<3x12x4xbf16, #tpu.memory_space<vmem>>, vector<1x12x4xbf16>
    %20 = vector.shape_cast %19 : vector<1x12x4xbf16> to vector<12x4xbf16>
    %cst_11 = arith.constant dense<0.000000e+00> : vector<64x4xf32>
    %21 = tpu.matmul %18, %20, %cst_11 {dimension_numbers = #tpu.dot_dimension_numbers<[1], [0], [0], [1], [0, 0, 1, 1], [], []>} : vector<64x12xbf16>, vector<12x4xbf16>, vector<64x4xf32> -> vector<64x4xf32>
    %22 = vector.shape_cast %21 : vector<64x4xf32> to vector<1x8x8x4xf32>
    %23 = vector.extract_strided_slice %17 {offsets = [0, 0, 0, 0], sizes = [1, 7, 8, 12], strides = [1, 1, 1, 1]} : vector<1x8x8x12xbf16> to vector<1x7x8x12xbf16>
    %24 = vector.shape_cast %23 : vector<1x7x8x12xbf16> to vector<56x12xbf16>
    %c0_12 = arith.constant 0 : index
    %c0_13 = arith.constant 0 : index
    %c0_14 = arith.constant 0 : index
    %25 = vector.load %arg4[%c0_12, %c0_13, %c0_14] : memref<3x12x4xbf16, #tpu.memory_space<vmem>>, vector<1x12x4xbf16>
    %26 = vector.shape_cast %25 : vector<1x12x4xbf16> to vector<12x4xbf16>
    %cst_15 = arith.constant dense<0.000000e+00> : vector<56x4xf32>
    %27 = tpu.matmul %24, %26, %cst_15 {dimension_numbers = #tpu.dot_dimension_numbers<[1], [0], [0], [1], [0, 0, 1, 1], [], []>} : vector<56x12xbf16>, vector<12x4xbf16>, vector<56x4xf32> -> vector<56x4xf32>
    %28 = vector.shape_cast %27 : vector<56x4xf32> to vector<1x7x8x4xf32>
    %29 = vector.extract_strided_slice %17 {offsets = [0, 1, 0, 0], sizes = [1, 7, 8, 12], strides = [1, 1, 1, 1]} : vector<1x8x8x12xbf16> to vector<1x7x8x12xbf16>
    %30 = vector.shape_cast %29 : vector<1x7x8x12xbf16> to vector<56x12xbf16>
    %c2 = arith.constant 2 : index
    %c0_16 = arith.constant 0 : index
    %c0_17 = arith.constant 0 : index
    %31 = vector.load %arg4[%c2, %c0_16, %c0_17] : memref<3x12x4xbf16, #tpu.memory_space<vmem>>, vector<1x12x4xbf16>
    %32 = vector.shape_cast %31 : vector<1x12x4xbf16> to vector<12x4xbf16>
    %cst_18 = arith.constant dense<0.000000e+00> : vector<56x4xf32>
    %33 = tpu.matmul %30, %32, %cst_18 {dimension_numbers = #tpu.dot_dimension_numbers<[1], [0], [0], [1], [0, 0, 1, 1], [], []>} : vector<56x12xbf16>, vector<12x4xbf16>, vector<56x4xf32> -> vector<56x4xf32>
    %34 = vector.shape_cast %33 : vector<56x4xf32> to vector<1x7x8x4xf32>
    %cst_19 = arith.constant 0.000000e+00 : f32
    %35 = vector.broadcast %cst_19 : f32 to vector<1x1x8x4xf32>
    %36 = tpu.concatenate %35, %28 in 1 : vector<1x1x8x4xf32>, vector<1x7x8x4xf32> -> vector<1x8x8x4xf32>
    %37 = arith.addf %22, %36 : vector<1x8x8x4xf32>
    %38 = tpu.concatenate %34, %35 in 1 : vector<1x7x8x4xf32>, vector<1x1x8x4xf32> -> vector<1x8x8x4xf32>
    %39 = arith.addf %37, %38 : vector<1x8x8x4xf32>
    %c0_20 = arith.constant 0 : index
    %c0_21 = arith.constant 0 : index
    %40 = vector.load %arg5[%c0_20, %c0_21] : memref<1x4xf32, #tpu.memory_space<vmem>>, vector<1x4xf32>
    %41 = vector.shape_cast %40 : vector<1x4xf32> to vector<1x1x1x4xf32>
    %42 = vector.broadcast %41 : vector<1x1x1x4xf32> to vector<1x8x8x4xf32>
    %43 = arith.addf %39, %42 : vector<1x8x8x4xf32>
    %cst_22 = arith.constant 0.000000e+00 : f32
    %44 = vector.broadcast %cst_22 : f32 to vector<1x8x8x4xf32>
    %45 = arith.maximumf %43, %44 : vector<1x8x8x4xf32>
    %46 = arith.truncf %45 : vector<1x8x8x4xf32> to vector<1x8x8x4xbf16>
    %cst_23 = arith.constant 0.000000e+00 : bf16
    %47 = vector.broadcast %cst_23 : bf16 to vector<1x8x1x4xbf16>
    %48 = vector.extract_strided_slice %46 {offsets = [0, 0, 0, 0], sizes = [1, 8, 7, 4], strides = [1, 1, 1, 1]} : vector<1x8x8x4xbf16> to vector<1x8x7x4xbf16>
    %49 = tpu.concatenate %47, %48 in 2 : vector<1x8x1x4xbf16>, vector<1x8x7x4xbf16> -> vector<1x8x8x4xbf16>
    %50 = vector.extract_strided_slice %46 {offsets = [0, 0, 1, 0], sizes = [1, 8, 7, 4], strides = [1, 1, 1, 1]} : vector<1x8x8x4xbf16> to vector<1x8x7x4xbf16>
    %51 = tpu.concatenate %50, %47 in 2 : vector<1x8x7x4xbf16>, vector<1x8x1x4xbf16> -> vector<1x8x8x4xbf16>
    %52 = tpu.concatenate %49, %46, %51 in 3 : vector<1x8x8x4xbf16>, vector<1x8x8x4xbf16>, vector<1x8x8x4xbf16> -> vector<1x8x8x12xbf16>
    %53 = vector.shape_cast %52 : vector<1x8x8x12xbf16> to vector<64x12xbf16>
    %c1_24 = arith.constant 1 : index
    %c0_25 = arith.constant 0 : index
    %c0_26 = arith.constant 0 : index
    %54 = vector.load %arg6[%c1_24, %c0_25, %c0_26] : memref<3x12x4xbf16, #tpu.memory_space<vmem>>, vector<1x12x4xbf16>
    %55 = vector.shape_cast %54 : vector<1x12x4xbf16> to vector<12x4xbf16>
    %cst_27 = arith.constant dense<0.000000e+00> : vector<64x4xf32>
    %56 = tpu.matmul %53, %55, %cst_27 {dimension_numbers = #tpu.dot_dimension_numbers<[1], [0], [0], [1], [0, 0, 1, 1], [], []>} : vector<64x12xbf16>, vector<12x4xbf16>, vector<64x4xf32> -> vector<64x4xf32>
    %57 = vector.shape_cast %56 : vector<64x4xf32> to vector<1x8x8x4xf32>
    %58 = vector.extract_strided_slice %52 {offsets = [0, 0, 0, 0], sizes = [1, 7, 8, 12], strides = [1, 1, 1, 1]} : vector<1x8x8x12xbf16> to vector<1x7x8x12xbf16>
    %59 = vector.shape_cast %58 : vector<1x7x8x12xbf16> to vector<56x12xbf16>
    %c0_28 = arith.constant 0 : index
    %c0_29 = arith.constant 0 : index
    %c0_30 = arith.constant 0 : index
    %60 = vector.load %arg6[%c0_28, %c0_29, %c0_30] : memref<3x12x4xbf16, #tpu.memory_space<vmem>>, vector<1x12x4xbf16>
    %61 = vector.shape_cast %60 : vector<1x12x4xbf16> to vector<12x4xbf16>
    %cst_31 = arith.constant dense<0.000000e+00> : vector<56x4xf32>
    %62 = tpu.matmul %59, %61, %cst_31 {dimension_numbers = #tpu.dot_dimension_numbers<[1], [0], [0], [1], [0, 0, 1, 1], [], []>} : vector<56x12xbf16>, vector<12x4xbf16>, vector<56x4xf32> -> vector<56x4xf32>
    %63 = vector.shape_cast %62 : vector<56x4xf32> to vector<1x7x8x4xf32>
    %64 = vector.extract_strided_slice %52 {offsets = [0, 1, 0, 0], sizes = [1, 7, 8, 12], strides = [1, 1, 1, 1]} : vector<1x8x8x12xbf16> to vector<1x7x8x12xbf16>
    %65 = vector.shape_cast %64 : vector<1x7x8x12xbf16> to vector<56x12xbf16>
    %c2_32 = arith.constant 2 : index
    %c0_33 = arith.constant 0 : index
    %c0_34 = arith.constant 0 : index
    %66 = vector.load %arg6[%c2_32, %c0_33, %c0_34] : memref<3x12x4xbf16, #tpu.memory_space<vmem>>, vector<1x12x4xbf16>
    %67 = vector.shape_cast %66 : vector<1x12x4xbf16> to vector<12x4xbf16>
    %cst_35 = arith.constant dense<0.000000e+00> : vector<56x4xf32>
    %68 = tpu.matmul %65, %67, %cst_35 {dimension_numbers = #tpu.dot_dimension_numbers<[1], [0], [0], [1], [0, 0, 1, 1], [], []>} : vector<56x12xbf16>, vector<12x4xbf16>, vector<56x4xf32> -> vector<56x4xf32>
    %69 = vector.shape_cast %68 : vector<56x4xf32> to vector<1x7x8x4xf32>
    %cst_36 = arith.constant 0.000000e+00 : f32
    %70 = vector.broadcast %cst_36 : f32 to vector<1x1x8x4xf32>
    %71 = tpu.concatenate %70, %63 in 1 : vector<1x1x8x4xf32>, vector<1x7x8x4xf32> -> vector<1x8x8x4xf32>
    %72 = arith.addf %57, %71 : vector<1x8x8x4xf32>
    %73 = tpu.concatenate %69, %70 in 1 : vector<1x7x8x4xf32>, vector<1x1x8x4xf32> -> vector<1x8x8x4xf32>
    %74 = arith.addf %72, %73 : vector<1x8x8x4xf32>
    %c0_37 = arith.constant 0 : index
    %c0_38 = arith.constant 0 : index
    %75 = vector.load %arg7[%c0_37, %c0_38] : memref<1x4xf32, #tpu.memory_space<vmem>>, vector<1x4xf32>
    %76 = vector.shape_cast %75 : vector<1x4xf32> to vector<1x1x1x4xf32>
    %77 = vector.broadcast %76 : vector<1x1x1x4xf32> to vector<1x8x8x4xf32>
    %78 = arith.addf %74, %77 : vector<1x8x8x4xf32>
    %cst_39 = arith.constant 0.000000e+00 : f32
    %79 = vector.broadcast %cst_39 : f32 to vector<1x8x8x4xf32>
    %80 = arith.maximumf %78, %79 : vector<1x8x8x4xf32>
    %81 = vector.shape_cast %80 : vector<1x8x8x4xf32> to vector<64x4xf32>
    %82 = arith.truncf %81 : vector<64x4xf32> to vector<64x4xbf16>
    %c0_40 = arith.constant 0 : index
    %c0_41 = arith.constant 0 : index
    %83 = vector.load %arg8[%c0_40, %c0_41] : memref<4x16xbf16, #tpu.memory_space<vmem>>, vector<4x16xbf16>
    %cst_42 = arith.constant dense<0.000000e+00> : vector<64x16xf32>
    %84 = tpu.matmul %82, %83, %cst_42 {dimension_numbers = #tpu.dot_dimension_numbers<[1], [0], [0], [1], [0, 0, 1, 1], [], []>} : vector<64x4xbf16>, vector<4x16xbf16>, vector<64x16xf32> -> vector<64x16xf32>
    %c0_43 = arith.constant 0 : index
    %c0_44 = arith.constant 0 : index
    %85 = vector.load %arg9[%c0_43, %c0_44] : memref<1x16xf32, #tpu.memory_space<vmem>>, vector<1x16xf32>
    %86 = vector.broadcast %85 : vector<1x16xf32> to vector<64x16xf32>
    %87 = arith.addf %84, %86 : vector<64x16xf32>
    %88 = arith.addf %87, %1 : vector<64x16xf32>
    %cst_45 = arith.constant 0.000000e+00 : f32
    %89 = vector.broadcast %cst_45 : f32 to vector<64x16xf32>
    %90 = arith.maximumf %88, %89 : vector<64x16xf32>
    %91 = vector.shape_cast %90 : vector<64x16xf32> to vector<1x8x128xf32>
    %92 = arith.truncf %91 : vector<1x8x128xf32> to vector<1x8x128xbf16>
    %c0_46 = arith.constant 0 : index
    %c0_47 = arith.constant 0 : index
    %c0_48 = arith.constant 0 : index
    %93 = vector.load %arg10[%c0_46, %c0_47, %c0_48] : memref<1x8x128xbf16, #tpu.memory_space<vmem>>, vector<1x8x128xbf16>
    tpu.vector_store %arg10[%c0_46, %c0_47, %c0_48], %92 {strides = array<i32>} : memref<1x8x128xbf16, #tpu.memory_space<vmem>>, vector<1x8x128xbf16>,
    return
  }
  func.func @transform_0(%arg0: i32) -> (i32, i32, i32, i32) {
    %c0_i32 = arith.constant 0 : i32
    %c0_i32_0 = arith.constant 0 : i32
    %c0_i32_1 = arith.constant 0 : i32
    %c0_i32_2 = arith.constant 0 : i32
    return %arg0, %c0_i32, %c0_i32_0, %c0_i32_1 : i32, i32, i32, i32
  }
  func.func @transform_1(%arg0: i32) -> (i32, i32) {
    %c0_i32 = arith.constant 0 : i32
    %c0_i32_0 = arith.constant 0 : i32
    %c0_i32_1 = arith.constant 0 : i32
    return %c0_i32, %c0_i32_0 : i32, i32
  }
  func.func @transform_2(%arg0: i32) -> (i32, i32) {
    %c0_i32 = arith.constant 0 : i32
    %c0_i32_0 = arith.constant 0 : i32
    %c0_i32_1 = arith.constant 0 : i32
    return %c0_i32, %c0_i32_0 : i32, i32
  }
  func.func @transform_3(%arg0: i32) -> (i32, i32, i32) {
    %c0_i32 = arith.constant 0 : i32
    %c0_i32_0 = arith.constant 0 : i32
    %c0_i32_1 = arith.constant 0 : i32
    %c0_i32_2 = arith.constant 0 : i32
    return %c0_i32, %c0_i32_0, %c0_i32_1 : i32, i32, i32
  }
  func.func @transform_4(%arg0: i32) -> (i32, i32) {
    %c0_i32 = arith.constant 0 : i32
    %c0_i32_0 = arith.constant 0 : i32
    %c0_i32_1 = arith.constant 0 : i32
    return %c0_i32, %c0_i32_0 : i32, i32
  }
  func.func @transform_5(%arg0: i32) -> (i32, i32, i32) {
    %c0_i32 = arith.constant 0 : i32
    %c0_i32_0 = arith.constant 0 : i32
    %c0_i32_1 = arith.constant 0 : i32
    %c0_i32_2 = arith.constant 0 : i32
    return %c0_i32, %c0_i32_0, %c0_i32_1 : i32, i32, i32
  }
  func.func @transform_6(%arg0: i32) -> (i32, i32) {
    %c0_i32 = arith.constant 0 : i32
    %c0_i32_0 = arith.constant 0 : i32
    %c0_i32_1 = arith.constant 0 : i32
    return %c0_i32, %c0_i32_0 : i32, i32
  }
  func.func @transform_7(%arg0: i32) -> (i32, i32) {
    %c0_i32 = arith.constant 0 : i32
    %c0_i32_0 = arith.constant 0 : i32
    %c0_i32_1 = arith.constant 0 : i32
    return %c0_i32, %c0_i32_0 : i32, i32
  }
  func.func @transform_8(%arg0: i32) -> (i32, i32) {
    %c0_i32 = arith.constant 0 : i32
    %c0_i32_0 = arith.constant 0 : i32
    %c0_i32_1 = arith.constant 0 : i32
    return %c0_i32, %c0_i32_0 : i32, i32
  }
  func.func @transform_9(%arg0: i32) -> (i32, i32, i32) {
    %c0_i32 = arith.constant 0 : i32
    %c0_i32_0 = arith.constant 0 : i32
    %c0_i32_1 = arith.constant 0 : i32
    return %arg0, %c0_i32, %c0_i32_0 : i32, i32, i32
  }
}

module attributes {stable_mosaic.version = 11 : i64} {
  func.func @bottleneck_kernel(%arg0: i32, %arg1: memref<1x8x8x16xf32, #tpu.memory_space<vmem>>, %arg2: memref<16x4xbf16, #tpu.memory_space<vmem>>, %arg3: memref<1x4xf32, #tpu.memory_space<vmem>>, %arg4: memref<3x12x4xbf16, #tpu.memory_space<vmem>>, %arg5: memref<1x4xf32, #tpu.memory_space<vmem>>, %arg6: memref<3x12x4xbf16, #tpu.memory_space<vmem>>, %arg7: memref<1x4xf32, #tpu.memory_space<vmem>>, %arg8: memref<4x16xbf16, #tpu.memory_space<vmem>>, %arg9: memref<1x16xf32, #tpu.memory_space<vmem>>, %arg10: memref<1x8x8x16xbf16, #tpu.memory_space<vmem>>) attributes {dimension_semantics = [#tpu.dimension_semantics<parallel>], iteration_bounds = array<i64: 2>, scalar_prefetch = 0 : i64, scratch_operands = 0 : i64, tpu.core_type = #tpu.core_type<tc>, window_params = [{transform_indices = @transform_0, window_bounds = array<i64: 1, 8, 8, 16>}, {pipeline_mode = #tpu.pipeline_mode<synchronous>, transform_indices = @transform_1, window_bounds = array<i64: 16, 4>}, {pipeline_mode = #tpu.pipeline_mode<synchronous>, transform_indices = @transform_2, window_bounds = array<i64: 1, 4>}, {pipeline_mode = #tpu.pipeline_mode<synchronous>, transform_indices = @transform_3, window_bounds = array<i64: 3, 12, 4>}, {pipeline_mode = #tpu.pipeline_mode<synchronous>, transform_indices = @transform_4, window_bounds = array<i64: 1, 4>}, {pipeline_mode = #tpu.pipeline_mode<synchronous>, transform_indices = @transform_5, window_bounds = array<i64: 3, 12, 4>}, {pipeline_mode = #tpu.pipeline_mode<synchronous>, transform_indices = @transform_6, window_bounds = array<i64: 1, 4>}, {pipeline_mode = #tpu.pipeline_mode<synchronous>, transform_indices = @transform_7, window_bounds = array<i64: 4, 16>}, {pipeline_mode = #tpu.pipeline_mode<synchronous>, transform_indices = @transform_8, window_bounds = array<i64: 1, 16>}, {transform_indices = @transform_9, window_bounds = array<i64: 1, 8, 8, 16>}]} {
    %c0 = arith.constant 0 : index
    %c0_0 = arith.constant 0 : index
    %c0_1 = arith.constant 0 : index
    %c0_2 = arith.constant 0 : index
    %0 = vector.load %arg1[%c0, %c0_0, %c0_1, %c0_2] : memref<1x8x8x16xf32, #tpu.memory_space<vmem>>, vector<1x8x8x16xf32>
    %1 = vector.shape_cast %0 : vector<1x8x8x16xf32> to vector<64x16xf32>
    %2 = arith.truncf %1 : vector<64x16xf32> to vector<64x16xbf16>
    %c0_3 = arith.constant 0 : index
    %c0_4 = arith.constant 0 : index
    %3 = vector.load %arg2[%c0_3, %c0_4] : memref<16x4xbf16, #tpu.memory_space<vmem>>, vector<16x4xbf16>
    %cst = arith.constant dense<0.000000e+00> : vector<64x4xf32>
    %4 = tpu.matmul %2, %3, %cst {dimension_numbers = #tpu.dot_dimension_numbers<[1], [0], [0], [1], [0, 0, 1, 1], [], []>} : vector<64x16xbf16>, vector<16x4xbf16>, vector<64x4xf32> -> vector<64x4xf32>
    %c0_5 = arith.constant 0 : index
    %c0_6 = arith.constant 0 : index
    %5 = vector.load %arg3[%c0_5, %c0_6] : memref<1x4xf32, #tpu.memory_space<vmem>>, vector<1x4xf32>
    %6 = vector.broadcast %5 : vector<1x4xf32> to vector<64x4xf32>
    %7 = arith.addf %4, %6 : vector<64x4xf32>
    %cst_7 = arith.constant 0.000000e+00 : f32
    %8 = vector.broadcast %cst_7 : f32 to vector<64x4xf32>
    %9 = arith.maximumf %7, %8 : vector<64x4xf32>
    %10 = vector.shape_cast %9 : vector<64x4xf32> to vector<1x8x8x4xf32>
    %11 = arith.truncf %10 : vector<1x8x8x4xf32> to vector<1x8x8x4xbf16>
    %cst_8 = arith.constant 0.000000e+00 : bf16
    %12 = vector.broadcast %cst_8 : bf16 to vector<1x8x1x4xbf16>
    %13 = vector.extract_strided_slice %11 {offsets = [0, 0, 0, 0], sizes = [1, 8, 7, 4], strides = [1, 1, 1, 1]} : vector<1x8x8x4xbf16> to vector<1x8x7x4xbf16>
    %14 = tpu.concatenate %12, %13 in 2 : vector<1x8x1x4xbf16>, vector<1x8x7x4xbf16> -> vector<1x8x8x4xbf16>
    %15 = vector.extract_strided_slice %11 {offsets = [0, 0, 1, 0], sizes = [1, 8, 7, 4], strides = [1, 1, 1, 1]} : vector<1x8x8x4xbf16> to vector<1x8x7x4xbf16>
    %16 = tpu.concatenate %15, %12 in 2 : vector<1x8x7x4xbf16>, vector<1x8x1x4xbf16> -> vector<1x8x8x4xbf16>
    %17 = tpu.concatenate %14, %11, %16 in 3 : vector<1x8x8x4xbf16>, vector<1x8x8x4xbf16>, vector<1x8x8x4xbf16> -> vector<1x8x8x12xbf16>
    %18 = vector.shape_cast %17 : vector<1x8x8x12xbf16> to vector<64x12xbf16>
    %c1 = arith.constant 1 : index
    %c0_9 = arith.constant 0 : index
    %c0_10 = arith.constant 0 : index
    %19 = vector.load %arg4[%c1, %c0_9, %c0_10] : memref<3x12x4xbf16, #tpu.memory_space<vmem>>, vector<1x12x4xbf16>
    %20 = vector.shape_cast %19 : vector<1x12x4xbf16> to vector<12x4xbf16>
    %cst_11 = arith.constant dense<0.000000e+00> : vector<64x4xf32>
    %21 = tpu.matmul %18, %20, %cst_11 {dimension_numbers = #tpu.dot_dimension_numbers<[1], [0], [0], [1], [0, 0, 1, 1], [], []>} : vector<64x12xbf16>, vector<12x4xbf16>, vector<64x4xf32> -> vector<64x4xf32>
    %22 = vector.shape_cast %21 : vector<64x4xf32> to vector<1x8x8x4xf32>
    %23 = vector.extract_strided_slice %17 {offsets = [0, 0, 0, 0], sizes = [1, 7, 8, 12], strides = [1, 1, 1, 1]} : vector<1x8x8x12xbf16> to vector<1x7x8x12xbf16>
    %24 = vector.shape_cast %23 : vector<1x7x8x12xbf16> to vector<56x12xbf16>
    %c0_12 = arith.constant 0 : index
    %c0_13 = arith.constant 0 : index
    %c0_14 = arith.constant 0 : index
    %25 = vector.load %arg4[%c0_12, %c0_13, %c0_14] : memref<3x12x4xbf16, #tpu.memory_space<vmem>>, vector<1x12x4xbf16>
    %26 = vector.shape_cast %25 : vector<1x12x4xbf16> to vector<12x4xbf16>
    %cst_15 = arith.constant dense<0.000000e+00> : vector<56x4xf32>
    %27 = tpu.matmul %24, %26, %cst_15 {dimension_numbers = #tpu.dot_dimension_numbers<[1], [0], [0], [1], [0, 0, 1, 1], [], []>} : vector<56x12xbf16>, vector<12x4xbf16>, vector<56x4xf32> -> vector<56x4xf32>
    %28 = vector.shape_cast %27 : vector<56x4xf32> to vector<1x7x8x4xf32>
    %29 = vector.extract_strided_slice %17 {offsets = [0, 1, 0, 0], sizes = [1, 7, 8, 12], strides = [1, 1, 1, 1]} : vector<1x8x8x12xbf16> to vector<1x7x8x12xbf16>
    %30 = vector.shape_cast %29 : vector<1x7x8x12xbf16> to vector<56x12xbf16>
    %c2 = arith.constant 2 : index
    %c0_16 = arith.constant 0 : index
    %c0_17 = arith.constant 0 : index
    %31 = vector.load %arg4[%c2, %c0_16, %c0_17] : memref<3x12x4xbf16, #tpu.memory_space<vmem>>, vector<1x12x4xbf16>
    %32 = vector.shape_cast %31 : vector<1x12x4xbf16> to vector<12x4xbf16>
    %cst_18 = arith.constant dense<0.000000e+00> : vector<56x4xf32>
    %33 = tpu.matmul %30, %32, %cst_18 {dimension_numbers = #tpu.dot_dimension_numbers<[1], [0], [0], [1], [0, 0, 1, 1], [], []>} : vector<56x12xbf16>, vector<12x4xbf16>, vector<56x4xf32> -> vector<56x4xf32>
    %34 = vector.shape_cast %33 : vector<56x4xf32> to vector<1x7x8x4xf32>
    %cst_19 = arith.constant 0.000000e+00 : f32
    %35 = vector.broadcast %cst_19 : f32 to vector<1x1x8x4xf32>
    %36 = tpu.concatenate %35, %28 in 1 : vector<1x1x8x4xf32>, vector<1x7x8x4xf32> -> vector<1x8x8x4xf32>
    %37 = arith.addf %22, %36 : vector<1x8x8x4xf32>
    %38 = tpu.concatenate %34, %35 in 1 : vector<1x7x8x4xf32>, vector<1x1x8x4xf32> -> vector<1x8x8x4xf32>
    %39 = arith.addf %37, %38 : vector<1x8x8x4xf32>
    %c0_20 = arith.constant 0 : index
    %c0_21 = arith.constant 0 : index
    %40 = vector.load %arg5[%c0_20, %c0_21] : memref<1x4xf32, #tpu.memory_space<vmem>>, vector<1x4xf32>
    %41 = vector.shape_cast %40 : vector<1x4xf32> to vector<1x1x1x4xf32>
    %42 = vector.broadcast %41 : vector<1x1x1x4xf32> to vector<1x8x8x4xf32>
    %43 = arith.addf %39, %42 : vector<1x8x8x4xf32>
    %cst_22 = arith.constant 0.000000e+00 : f32
    %44 = vector.broadcast %cst_22 : f32 to vector<1x8x8x4xf32>
    %45 = arith.maximumf %43, %44 : vector<1x8x8x4xf32>
    %46 = arith.truncf %45 : vector<1x8x8x4xf32> to vector<1x8x8x4xbf16>
    %cst_23 = arith.constant 0.000000e+00 : bf16
    %47 = vector.broadcast %cst_23 : bf16 to vector<1x8x1x4xbf16>
    %48 = vector.extract_strided_slice %46 {offsets = [0, 0, 0, 0], sizes = [1, 8, 7, 4], strides = [1, 1, 1, 1]} : vector<1x8x8x4xbf16> to vector<1x8x7x4xbf16>
    %49 = tpu.concatenate %47, %48 in 2 : vector<1x8x1x4xbf16>, vector<1x8x7x4xbf16> -> vector<1x8x8x4xbf16>
    %50 = vector.extract_strided_slice %46 {offsets = [0, 0, 1, 0], sizes = [1, 8, 7, 4], strides = [1, 1, 1, 1]} : vector<1x8x8x4xbf16> to vector<1x8x7x4xbf16>
    %51 = tpu.concatenate %50, %47 in 2 : vector<1x8x7x4xbf16>, vector<1x8x1x4xbf16> -> vector<1x8x8x4xbf16>
    %52 = tpu.concatenate %49, %46, %51 in 3 : vector<1x8x8x4xbf16>, vector<1x8x8x4xbf16>, vector<1x8x8x4xbf16> -> vector<1x8x8x12xbf16>
    %53 = vector.shape_cast %52 : vector<1x8x8x12xbf16> to vector<64x12xbf16>
    %c1_24 = arith.constant 1 : index
    %c0_25 = arith.constant 0 : index
    %c0_26 = arith.constant 0 : index
    %54 = vector.load %arg6[%c1_24, %c0_25, %c0_26] : memref<3x12x4xbf16, #tpu.memory_space<vmem>>, vector<1x12x4xbf16>
    %55 = vector.shape_cast %54 : vector<1x12x4xbf16> to vector<12x4xbf16>
    %cst_27 = arith.constant dense<0.000000e+00> : vector<64x4xf32>
    %56 = tpu.matmul %53, %55, %cst_27 {dimension_numbers = #tpu.dot_dimension_numbers<[1], [0], [0], [1], [0, 0, 1, 1], [], []>} : vector<64x12xbf16>, vector<12x4xbf16>, vector<64x4xf32> -> vector<64x4xf32>
    %57 = vector.shape_cast %56 : vector<64x4xf32> to vector<1x8x8x4xf32>
    %58 = vector.extract_strided_slice %52 {offsets = [0, 0, 0, 0], sizes = [1, 7, 8, 12], strides = [1, 1, 1, 1]} : vector<1x8x8x12xbf16> to vector<1x7x8x12xbf16>
    %59 = vector.shape_cast %58 : vector<1x7x8x12xbf16> to vector<56x12xbf16>
    %c0_28 = arith.constant 0 : index
    %c0_29 = arith.constant 0 : index
    %c0_30 = arith.constant 0 : index
    %60 = vector.load %arg6[%c0_28, %c0_29, %c0_30] : memref<3x12x4xbf16, #tpu.memory_space<vmem>>, vector<1x12x4xbf16>
    %61 = vector.shape_cast %60 : vector<1x12x4xbf16> to vector<12x4xbf16>
    %cst_31 = arith.constant dense<0.000000e+00> : vector<56x4xf32>
    %62 = tpu.matmul %59, %61, %cst_31 {dimension_numbers = #tpu.dot_dimension_numbers<[1], [0], [0], [1], [0, 0, 1, 1], [], []>} : vector<56x12xbf16>, vector<12x4xbf16>, vector<56x4xf32> -> vector<56x4xf32>
    %63 = vector.shape_cast %62 : vector<56x4xf32> to vector<1x7x8x4xf32>
    %64 = vector.extract_strided_slice %52 {offsets = [0, 1, 0, 0], sizes = [1, 7, 8, 12], strides = [1, 1, 1, 1]} : vector<1x8x8x12xbf16> to vector<1x7x8x12xbf16>
    %65 = vector.shape_cast %64 : vector<1x7x8x12xbf16> to vector<56x12xbf16>
    %c2_32 = arith.constant 2 : index
    %c0_33 = arith.constant 0 : index
    %c0_34 = arith.constant 0 : index
    %66 = vector.load %arg6[%c2_32, %c0_33, %c0_34] : memref<3x12x4xbf16, #tpu.memory_space<vmem>>, vector<1x12x4xbf16>
    %67 = vector.shape_cast %66 : vector<1x12x4xbf16> to vector<12x4xbf16>
    %cst_35 = arith.constant dense<0.000000e+00> : vector<56x4xf32>
    %68 = tpu.matmul %65, %67, %cst_35 {dimension_numbers = #tpu.dot_dimension_numbers<[1], [0], [0], [1], [0, 0, 1, 1], [], []>} : vector<56x12xbf16>, vector<12x4xbf16>, vector<56x4xf32> -> vector<56x4xf32>
    %69 = vector.shape_cast %68 : vector<56x4xf32> to vector<1x7x8x4xf32>
    %cst_36 = arith.constant 0.000000e+00 : f32
    %70 = vector.broadcast %cst_36 : f32 to vector<1x1x8x4xf32>
    %71 = tpu.concatenate %70, %63 in 1 : vector<1x1x8x4xf32>, vector<1x7x8x4xf32> -> vector<1x8x8x4xf32>
    %72 = arith.addf %57, %71 : vector<1x8x8x4xf32>
    %73 = tpu.concatenate %69, %70 in 1 : vector<1x7x8x4xf32>, vector<1x1x8x4xf32> -> vector<1x8x8x4xf32>
    %74 = arith.addf %72, %73 : vector<1x8x8x4xf32>
    %c0_37 = arith.constant 0 : index
    %c0_38 = arith.constant 0 : index
    %75 = vector.load %arg7[%c0_37, %c0_38] : memref<1x4xf32, #tpu.memory_space<vmem>>, vector<1x4xf32>
    %76 = vector.shape_cast %75 : vector<1x4xf32> to vector<1x1x1x4xf32>
    %77 = vector.broadcast %76 : vector<1x1x1x4xf32> to vector<1x8x8x4xf32>
    %78 = arith.addf %74, %77 : vector<1x8x8x4xf32>
    %cst_39 = arith.constant 0.000000e+00 : f32
    %79 = vector.broadcast %cst_39 : f32 to vector<1x8x8x4xf32>
    %80 = arith.maximumf %78, %79 : vector<1x8x8x4xf32>
    %81 = vector.shape_cast %80 : vector<1x8x8x4xf32> to vector<64x4xf32>
    %82 = arith.truncf %81 : vector<64x4xf32> to vector<64x4xbf16>
    %c0_40 = arith.constant 0 : index
    %c0_41 = arith.constant 0 : index
    %83 = vector.load %arg8[%c0_40, %c0_41] : memref<4x16xbf16, #tpu.memory_space<vmem>>, vector<4x16xbf16>
    %cst_42 = arith.constant dense<0.000000e+00> : vector<64x16xf32>
    %84 = tpu.matmul %82, %83, %cst_42 {dimension_numbers = #tpu.dot_dimension_numbers<[1], [0], [0], [1], [0, 0, 1, 1], [], []>} : vector<64x4xbf16>, vector<4x16xbf16>, vector<64x16xf32> -> vector<64x16xf32>
    %c0_43 = arith.constant 0 : index
    %c0_44 = arith.constant 0 : index
    %85 = vector.load %arg9[%c0_43, %c0_44] : memref<1x16xf32, #tpu.memory_space<vmem>>, vector<1x16xf32>
    %86 = vector.broadcast %85 : vector<1x16xf32> to vector<64x16xf32>
    %87 = arith.addf %84, %86 : vector<64x16xf32>
    %88 = arith.addf %87, %1 : vector<64x16xf32>
    %cst_45 = arith.constant 0.000000e+00 : f32
    %89 = vector.broadcast %cst_45 : f32 to vector<64x16xf32>
    %90 = arith.maximumf %88, %89 : vector<64x16xf32>
    %91 = vector.shape_cast %90 : vector<64x16xf32> to vector<1x8x8x16xf32>
    %92 = arith.truncf %91 : vector<1x8x8x16xf32> to vector<1x8x8x16xbf16>
    %c0_46 = arith.constant 0 : index
    %c0_47 = arith.constant 0 : index
    %c0_48 = arith.constant 0 : index
    %c0_49 = arith.constant 0 : index
    %93 = vector.load %arg10[%c0_46, %c0_47, %c0_48, %c0_49] : memref<1x8x8x16xbf16, #tpu.memory_space<vmem>>, vector<1x8x8x16xbf16>
    tpu.vector_store %arg10[%c0_46, %c0_47, %c0_48, %c0_49], %92 {strides = array<i32>} : memref<1x8x8x16xbf16, #tpu.memory_space<vmem>>, vector<1x8x8x16xbf16>,
    return
  }
  func.func @transform_0(%arg0: i32) -> (i32, i32, i32, i32) {
    %c0_i32 = arith.constant 0 : i32
    %c0_i32_0 = arith.constant 0 : i32
    %c0_i32_1 = arith.constant 0 : i32
    %c0_i32_2 = arith.constant 0 : i32
    return %arg0, %c0_i32, %c0_i32_0, %c0_i32_1 : i32, i32, i32, i32
  }
  func.func @transform_1(%arg0: i32) -> (i32, i32) {
    %c0_i32 = arith.constant 0 : i32
    %c0_i32_0 = arith.constant 0 : i32
    %c0_i32_1 = arith.constant 0 : i32
    return %c0_i32, %c0_i32_0 : i32, i32
  }
  func.func @transform_2(%arg0: i32) -> (i32, i32) {
    %c0_i32 = arith.constant 0 : i32
    %c0_i32_0 = arith.constant 0 : i32
    %c0_i32_1 = arith.constant 0 : i32
    return %c0_i32, %c0_i32_0 : i32, i32
  }
  func.func @transform_3(%arg0: i32) -> (i32, i32, i32) {
    %c0_i32 = arith.constant 0 : i32
    %c0_i32_0 = arith.constant 0 : i32
    %c0_i32_1 = arith.constant 0 : i32
    %c0_i32_2 = arith.constant 0 : i32
    return %c0_i32, %c0_i32_0, %c0_i32_1 : i32, i32, i32
  }
  func.func @transform_4(%arg0: i32) -> (i32, i32) {
    %c0_i32 = arith.constant 0 : i32
    %c0_i32_0 = arith.constant 0 : i32
    %c0_i32_1 = arith.constant 0 : i32
    return %c0_i32, %c0_i32_0 : i32, i32
  }
  func.func @transform_5(%arg0: i32) -> (i32, i32, i32) {
    %c0_i32 = arith.constant 0 : i32
    %c0_i32_0 = arith.constant 0 : i32
    %c0_i32_1 = arith.constant 0 : i32
    %c0_i32_2 = arith.constant 0 : i32
    return %c0_i32, %c0_i32_0, %c0_i32_1 : i32, i32, i32
  }
  func.func @transform_6(%arg0: i32) -> (i32, i32) {
    %c0_i32 = arith.constant 0 : i32
    %c0_i32_0 = arith.constant 0 : i32
    %c0_i32_1 = arith.constant 0 : i32
    return %c0_i32, %c0_i32_0 : i32, i32
  }
  func.func @transform_7(%arg0: i32) -> (i32, i32) {
    %c0_i32 = arith.constant 0 : i32
    %c0_i32_0 = arith.constant 0 : i32
    %c0_i32_1 = arith.constant 0 : i32
    return %c0_i32, %c0_i32_0 : i32, i32
  }
  func.func @transform_8(%arg0: i32) -> (i32, i32) {
    %c0_i32 = arith.constant 0 : i32
    %c0_i32_0 = arith.constant 0 : i32
    %c0_i32_1 = arith.constant 0 : i32
    return %c0_i32, %c0_i32_0 : i32, i32
  }
  func.func @transform_9(%arg0: i32) -> (i32, i32, i32, i32) {
    %c0_i32 = arith.constant 0 : i32
    %c0_i32_0 = arith.constant 0 : i32
    %c0_i32_1 = arith.constant 0 : i32
    %c0_i32_2 = arith.constant 0 : i32
    return %arg0, %c0_i32, %c0_i32_0, %c0_i32_1 : i32, i32, i32, i32
  }
}

</mosaic_0001>

<llo_original>
// kernel: tpu_custom_call.1
$region0: #{tpu_custom_call.1}
  #allocation0 [shape = 'u32[]', space=smem, size = 0x4, offset = 0x4, fixed_abs, tag = 'smem constant byte address 0x4 - core index']
  #allocation1 [shape = 'u32[144,128]{1,0:T(1,128)}', space=vmem, size = 0x12000, scoped, tag = 'internal scratch']
  %s0 = inlined_call_operand.hbm [shape: f32[2,8,8,16], index: 0, kind: input, shape index: {}]
  %s1 = inlined_call_operand.vmem [shape: bf16[16,4], index: 1, kind: input, shape index: {}]
  %s2 = inlined_call_operand.vmem [shape: f32[1,4], index: 2, kind: input, shape index: {}]
  %s3 = inlined_call_operand.vmem [shape: bf16[3,12,4], index: 3, kind: input, shape index: {}]
  %s4 = inlined_call_operand.vmem [shape: f32[1,4], index: 4, kind: input, shape index: {}]
  %s5 = inlined_call_operand.vmem [shape: bf16[3,12,4], index: 5, kind: input, shape index: {}]
  %s6 = inlined_call_operand.vmem [shape: f32[1,4], index: 6, kind: input, shape index: {}]
  %s7 = inlined_call_operand.vmem [shape: bf16[4,16], index: 7, kind: input, shape index: {}]
  %s8 = inlined_call_operand.vmem [shape: f32[1,16], index: 8, kind: input, shape index: {}]
  %s9 = inlined_call_operand.hbm [shape: bf16[2,8,8,16], index: 9, kind: output, shape index: {}]
  %s10 = sld [smem:[#allocation0]]
  $region73: #{tpu_custom_call.1} parent=0
    _
  %s12 = ssub.s32 1, %s10
  %s13 = scalar_select 0, %s12, %s10
  $region1: #{tpu_custom_call.1} parent=0
    #allocation2 [shape = 'u8[65536]{0}', space=vmem, size = 0x10000, scoped, tag = 'input window, operand 0']
    #allocation3 [shape = 's32[2]{0}', space=sflag, size = 0x8, scoped, tag = 'scoped memory for tpu_custom_call.1']
    #allocation4 [shape = 's32[2]{0}', space=sflag, size = 0x8, scoped, tag = 'scoped memory for tpu_custom_call.1']
    #allocation5 [shape = 'u8[32768]{0}', space=vmem, size = 0x8000, scoped, tag = 'output window, operand 0']
    %14 = vsyncpa [#allocation3], 0
    %s15 = scalar_lea.sflag [#allocation3], 1
    %16 = vsyncpa %s15, 0
    %17 = vsyncpa [#allocation4], 0
    %s18 = scalar_lea.sflag [#allocation4], 1
    %19 = vsyncpa %s18, 0
    loop: start=0, step=1, limit=4
    $region2: #{tpu_custom_call.1} parent=1 // loop_pre_header
      _
    $region3: #{tpu_custom_call.1} parent=1 // loop_header
      %s21 = sphi 0, %s25
      %p22 = scmp.ge.s32.totalorder %s21, 4
      %s31 = sphi 0, %s33
      %s34 = sphi 0, %s31
      %s35 = sphi 0, %s34
      %s51 = sphi 0, %s35
      %s55 = sphi 0, %s55
      %s57 = sphi 0, %s55
      %s58 = sphi 0, %s57
      %s72 = sphi 0, %s58
      %s76 = sphi 0, %s76
      %s78 = sphi 0, %s76
      %s79 = sphi 0, %s78
      %s93 = sphi 0, %s79
      %s97 = sphi 0, %s97
      %s99 = sphi 0, %s97
      %s100 = sphi 0, %s99
      %s114 = sphi 0, %s100
      %s118 = sphi 0, %s118
      %s120 = sphi 0, %s118
      %s121 = sphi 0, %s120
      %s135 = sphi 0, %s121
      %s139 = sphi 0, %s139
      %s141 = sphi 0, %s139
      %s142 = sphi 0, %s141
      %s156 = sphi 0, %s142
      %s160 = sphi 0, %s160
      %s162 = sphi 0, %s160
      %s163 = sphi 0, %s162
      %s177 = sphi 0, %s163
      %s181 = sphi 0, %s181
      %s183 = sphi 0, %s181
      %s184 = sphi 0, %s183
      %s198 = sphi 0, %s184
      %s202 = sphi 0, %s202
      %s204 = sphi 0, %s202
      %s205 = sphi 0, %s204
      %s219 = sphi 0, %s205
      %s225 = sphi 0, %s227
      %s228 = sphi 0, %s225
      %s229 = sphi 0, %s228
      %s245 = sphi 0, %s229
    $region4: #{tpu_custom_call.1} parent=1 // loop_header_branch
      %24 = sbr.rel (%p22) target = $region8
    $region5: #{tpu_custom_call.1} parent=1 // loop_body
      %s26 = ssub.s32 %s21, 1
      %s27 = ssub.s32 %s21, 2
      %s28 = sadd.s32 %s21, 1
      %s29 = ssub.s32 %s21, %s28
      %p30 = scmp.eq.s32.totalorder %s29, 0
      %s32 = sadd.s32 %s31, 1
      %s33 = scalar_select %p30, %s31, %s32
      %p36 = pneg %p30
      %p37 = scmp.eq.s32.totalorder %s21, 1
      %p38 = por %p36, %p37
      %p39 = scmp.ne.s32.totalorder %s31, %s34
      %p40 = scmp.eq.s32.totalorder %s21, 0
      %p41 = por %p39, %p40
      %p42 = scmp.ne.s32.totalorder %s31, %s34
      %p43 = scmp.eq.s32.totalorder %s26, 1
      %p44 = por %p42, %p43
      %p45 = scmp.ne.s32.totalorder %s34, %s35
      %p46 = scmp.eq.s32.totalorder %s26, 0
      %p47 = por %p45, %p46
      %p48 = scmp.ne.s32.totalorder %s34, %s35
      %p49 = scmp.eq.s32.totalorder %s27, 1
      %p50 = por %p48, %p49
      %p52 = scmp.ne.s32.totalorder %s35, %s51
      %p53 = scmp.eq.s32.totalorder %s27, 0
      %p54 = por %p52, %p53
      %s56 = sadd.s32 %s55, 1
      %p59 = scmp.eq.s32.totalorder %s21, 1
      %p60 = scmp.ne.s32.totalorder %s55, %s57
      %p61 = scmp.eq.s32.totalorder %s21, 0
      %p62 = por %p60, %p61
      %p63 = scmp.ne.s32.totalorder %s55, %s57
      %p64 = scmp.eq.s32.totalorder %s26, 1
      %p65 = por %p63, %p64
      %p66 = scmp.ne.s32.totalorder %s57, %s58
      %p67 = scmp.eq.s32.totalorder %s26, 0
      %p68 = por %p66, %p67
      %p69 = scmp.ne.s32.totalorder %s57, %s58
      %p70 = scmp.eq.s32.totalorder %s27, 1
      %p71 = por %p69, %p70
      %p73 = scmp.ne.s32.totalorder %s58, %s72
      %p74 = scmp.eq.s32.totalorder %s27, 0
      %p75 = por %p73, %p74
      %s77 = sadd.s32 %s76, 1
      %p80 = scmp.eq.s32.totalorder %s21, 1
      %p81 = scmp.ne.s32.totalorder %s76, %s78
      %p82 = scmp.eq.s32.totalorder %s21, 0
      %p83 = por %p81, %p82
      %p84 = scmp.ne.s32.totalorder %s76, %s78
      %p85 = scmp.eq.s32.totalorder %s26, 1
      %p86 = por %p84, %p85
      %p87 = scmp.ne.s32.totalorder %s78, %s79
      %p88 = scmp.eq.s32.totalorder %s26, 0
      %p89 = por %p87, %p88
      %p90 = scmp.ne.s32.totalorder %s78, %s79
      %p91 = scmp.eq.s32.totalorder %s27, 1
      %p92 = por %p90, %p91
      %p94 = scmp.ne.s32.totalorder %s79, %s93
      %p95 = scmp.eq.s32.totalorder %s27, 0
      %p96 = por %p94, %p95
      %s98 = sadd.s32 %s97, 1
      %p101 = scmp.eq.s32.totalorder %s21, 1
      %p102 = scmp.ne.s32.totalorder %s97, %s99
      %p103 = scmp.eq.s32.totalorder %s21, 0
      %p104 = por %p102, %p103
      %p105 = scmp.ne.s32.totalorder %s97, %s99
      %p106 = scmp.eq.s32.totalorder %s26, 1
      %p107 = por %p105, %p106
      %p108 = scmp.ne.s32.totalorder %s99, %s100
      %p109 = scmp.eq.s32.totalorder %s26, 0
      %p110 = por %p108, %p109
      %p111 = scmp.ne.s32.totalorder %s99, %s100
      %p112 = scmp.eq.s32.totalorder %s27, 1
      %p113 = por %p111, %p112
      %p115 = scmp.ne.s32.totalorder %s100, %s114
      %p116 = scmp.eq.s32.totalorder %s27, 0
      %p117 = por %p115, %p116
      %s119 = sadd.s32 %s118, 1
      %p122 = scmp.eq.s32.totalorder %s21, 1
      %p123 = scmp.ne.s32.totalorder %s118, %s120
      %p124 = scmp.eq.s32.totalorder %s21, 0
      %p125 = por %p123, %p124
      %p126 = scmp.ne.s32.totalorder %s118, %s120
      %p127 = scmp.eq.s32.totalorder %s26, 1
      %p128 = por %p126, %p127
      %p129 = scmp.ne.s32.totalorder %s120, %s121
      %p130 = scmp.eq.s32.totalorder %s26, 0
      %p131 = por %p129, %p130
      %p132 = scmp.ne.s32.totalorder %s120, %s121
      %p133 = scmp.eq.s32.totalorder %s27, 1
      %p134 = por %p132, %p133
      %p136 = scmp.ne.s32.totalorder %s121, %s135
      %p137 = scmp.eq.s32.totalorder %s27, 0
      %p138 = por %p136, %p137
      %s140 = sadd.s32 %s139, 1
      %p143 = scmp.eq.s32.totalorder %s21, 1
      %p144 = scmp.ne.s32.totalorder %s139, %s141
      %p145 = scmp.eq.s32.totalorder %s21, 0
      %p146 = por %p144, %p145
      %p147 = scmp.ne.s32.totalorder %s139, %s141
      %p148 = scmp.eq.s32.totalorder %s26, 1
      %p149 = por %p147, %p148
      %p150 = scmp.ne.s32.totalorder %s141, %s142
      %p151 = scmp.eq.s32.totalorder %s26, 0
      %p152 = por %p150, %p151
      %p153 = scmp.ne.s32.totalorder %s141, %s142
      %p154 = scmp.eq.s32.totalorder %s27, 1
      %p155 = por %p153, %p154
      %p157 = scmp.ne.s32.totalorder %s142, %s156
      %p158 = scmp.eq.s32.totalorder %s27, 0
      %p159 = por %p157, %p158
      %s161 = sadd.s32 %s160, 1
      %p164 = scmp.eq.s32.totalorder %s21, 1
      %p165 = scmp.ne.s32.totalorder %s160, %s162
      %p166 = scmp.eq.s32.totalorder %s21, 0
      %p167 = por %p165, %p166
      %p168 = scmp.ne.s32.totalorder %s160, %s162
      %p169 = scmp.eq.s32.totalorder %s26, 1
      %p170 = por %p168, %p169
      %p171 = scmp.ne.s32.totalorder %s162, %s163
      %p172 = scmp.eq.s32.totalorder %s26, 0
      %p173 = por %p171, %p172
      %p174 = scmp.ne.s32.totalorder %s162, %s163
      %p175 = scmp.eq.s32.totalorder %s27, 1
      %p176 = por %p174, %p175
      %p178 = scmp.ne.s32.totalorder %s163, %s177
      %p179 = scmp.eq.s32.totalorder %s27, 0
      %p180 = por %p178, %p179
      %s182 = sadd.s32 %s181, 1
      %p185 = scmp.eq.s32.totalorder %s21, 1
      %p186 = scmp.ne.s32.totalorder %s181, %s183
      %p187 = scmp.eq.s32.totalorder %s21, 0
      %p188 = por %p186, %p187
      %p189 = scmp.ne.s32.totalorder %s181, %s183
      %p190 = scmp.eq.s32.totalorder %s26, 1
      %p191 = por %p189, %p190
      %p192 = scmp.ne.s32.totalorder %s183, %s184
      %p193 = scmp.eq.s32.totalorder %s26, 0
      %p194 = por %p192, %p193
      %p195 = scmp.ne.s32.totalorder %s183, %s184
      %p196 = scmp.eq.s32.totalorder %s27, 1
      %p197 = por %p195, %p196
      %p199 = scmp.ne.s32.totalorder %s184, %s198
      %p200 = scmp.eq.s32.totalorder %s27, 0
      %p201 = por %p199, %p200
      %s203 = sadd.s32 %s202, 1
      %p206 = scmp.eq.s32.totalorder %s21, 1
      %p207 = scmp.ne.s32.totalorder %s202, %s204
      %p208 = scmp.eq.s32.totalorder %s21, 0
      %p209 = por %p207, %p208
      %p210 = scmp.ne.s32.totalorder %s202, %s204
      %p211 = scmp.eq.s32.totalorder %s26, 1
      %p212 = por %p210, %p211
      %p213 = scmp.ne.s32.totalorder %s204, %s205
      %p214 = scmp.eq.s32.totalorder %s26, 0
      %p215 = por %p213, %p214
      %p216 = scmp.ne.s32.totalorder %s204, %s205
      %p217 = scmp.eq.s32.totalorder %s27, 1
      %p218 = por %p216, %p217
      %p220 = scmp.ne.s32.totalorder %s205, %s219
      %p221 = scmp.eq.s32.totalorder %s27, 0
      %p222 = por %p220, %p221
      %s223 = ssub.s32 %s21, %s28
      %p224 = scmp.eq.s32.totalorder %s223, 0
      %s226 = sadd.s32 %s225, 1
      %s227 = scalar_select %p224, %s225, %s226
      %p230 = pneg %p224
      %p231 = scmp.eq.s32.totalorder %s21, 1
      %p232 = por %p230, %p231
      %p233 = scmp.ne.s32.totalorder %s225, %s228
      %p234 = scmp.eq.s32.totalorder %s21, 0
      %p235 = por %p233, %p234
      %p236 = scmp.ne.s32.totalorder %s225, %s228
      %p237 = scmp.eq.s32.totalorder %s26, 1
      %p238 = por %p236, %p237
      %p239 = scmp.ne.s32.totalorder %s228, %s229
      %p240 = scmp.eq.s32.totalorder %s26, 0
      %p241 = por %p239, %p240
      %p242 = scmp.ne.s32.totalorder %s228, %s229
      %p243 = scmp.eq.s32.totalorder %s27, 1
      %p244 = por %p242, %p243
      %p246 = scmp.ne.s32.totalorder %s229, %s245
      %p247 = scmp.eq.s32.totalorder %s27, 0
      %p248 = por %p246, %p247
      %p249 = scmp.le.s32.totalorder 1, %s21
      %p250 = scmp.lt.s32.totalorder %s21, 3
      %p251 = pnand %p249, %p250
      %p252 = pneg %p251
      // Predicated region
      $region9: #{tpu_custom_call.1} parent=5 // pred_check
        _
      $region10: #{tpu_custom_call.1} parent=5 // pred_check_branch
        %254 = sbr.rel (%p251) target = $region12
      $region11: #{tpu_custom_call.1} parent=5 // pred_region
        %s255 = ssub.s32 %s21, 1
        // Predicated region
        $region13: #{tpu_custom_call.1} parent=11 // pred_check
          %p256 = pneg %p68
        $region14: #{tpu_custom_call.1} parent=11 // pred_check_branch
          %258 = sbr.rel (%p256) target = $region16
        $region15: #{tpu_custom_call.1} parent=11 // pred_region
          _
        $region16: #{tpu_custom_call.1} parent=11 // pred_fallthru
          _
        // Predicated region
        $region17: #{tpu_custom_call.1} parent=11 // pred_check
          %p259 = pneg %p89
        $region18: #{tpu_custom_call.1} parent=11 // pred_check_branch
          %261 = sbr.rel (%p259) target = $region20
        $region19: #{tpu_custom_call.1} parent=11 // pred_region
          _
        $region20: #{tpu_custom_call.1} parent=11 // pred_fallthru
          _
        // Predicated region
        $region21: #{tpu_custom_call.1} parent=11 // pred_check
          %p262 = pneg %p110
        $region22: #{tpu_custom_call.1} parent=11 // pred_check_branch
          %264 = sbr.rel (%p262) target = $region24
        $region23: #{tpu_custom_call.1} parent=11 // pred_region
          _
        $region24: #{tpu_custom_call.1} parent=11 // pred_fallthru
          _
        // Predicated region
        $region25: #{tpu_custom_call.1} parent=11 // pred_check
          %p265 = pneg %p131
        $region26: #{tpu_custom_call.1} parent=11 // pred_check_branch
          %267 = sbr.rel (%p265) target = $region28
        $region27: #{tpu_custom_call.1} parent=11 // pred_region
          _
        $region28: #{tpu_custom_call.1} parent=11 // pred_fallthru
          _
        // Predicated region
        $region29: #{tpu_custom_call.1} parent=11 // pred_check
          %p268 = pneg %p152
        $region30: #{tpu_custom_call.1} parent=11 // pred_check_branch
          %270 = sbr.rel (%p268) target = $region32
        $region31: #{tpu_custom_call.1} parent=11 // pred_region
          _
        $region32: #{tpu_custom_call.1} parent=11 // pred_fallthru
          _
        // Predicated region
        $region33: #{tpu_custom_call.1} parent=11 // pred_check
          %p271 = pneg %p173
        $region34: #{tpu_custom_call.1} parent=11 // pred_check_branch
          %273 = sbr.rel (%p271) target = $region36
        $region35: #{tpu_custom_call.1} parent=11 // pred_region
          _
        $region36: #{tpu_custom_call.1} parent=11 // pred_fallthru
          _
        // Predicated region
        $region37: #{tpu_custom_call.1} parent=11 // pred_check
          %p274 = pneg %p194
        $region38: #{tpu_custom_call.1} parent=11 // pred_check_branch
          %276 = sbr.rel (%p274) target = $region40
        $region39: #{tpu_custom_call.1} parent=11 // pred_region
          _
        $region40: #{tpu_custom_call.1} parent=11 // pred_fallthru
          _
        // Predicated region
        $region41: #{tpu_custom_call.1} parent=11 // pred_check
          %p277 = pneg %p215
        $region42: #{tpu_custom_call.1} parent=11 // pred_check_branch
          %279 = sbr.rel (%p277) target = $region44
        $region43: #{tpu_custom_call.1} parent=11 // pred_region
          _
        $region44: #{tpu_custom_call.1} parent=11 // pred_fallthru
          _
      $region12: #{tpu_custom_call.1} parent=5 // pred_fallthru
        _
      %p280 = scmp.lt.s32.totalorder %s21, 2
      // Predicated region
      $region45: #{tpu_custom_call.1} parent=5 // pred_check
        %p281 = pneg %p280
      $region46: #{tpu_custom_call.1} parent=5 // pred_check_branch
        %283 = sbr.rel (%p281) target = $region48
      $region47: #{tpu_custom_call.1} parent=5 // pred_region
        // Predicated region
        $region49: #{tpu_custom_call.1} parent=47 // pred_check
          %p284 = pneg %p41
        $region50: #{tpu_custom_call.1} parent=47 // pred_check_branch
          %286 = sbr.rel (%p284) target = $region52
        $region51: #{tpu_custom_call.1} parent=47 // pred_region
          %s287 = sand.u32 %s31, 1
          %s288 = scalar_lea.sflag [#allocation3], %s287
          %s289 = sand.u32 %s31, 1
          %s290 = smul.addr %s289, 64
          %s291 = scalar_lea.vmem [#allocation2], %s290
          %s293 = ssub.s32 1024, 1024
          %294 = vsyncadd %s288, %s293
          %s295 = smul.addr %s21, 8
          %s296 = smul.addr %s295, 128
          %s297 = scalar_lea.hbm %s0, %s296
          %s298 = sshll.u32 %s291, 4
          %s299 = int_to_ptr.vmem [resolvable:$true] %s298
          %304 = dma.hbm_to_vmem [thread:$0]  %s297, 1024, %s299, %s288, 128, 128, 8
        $region52: #{tpu_custom_call.1} parent=47 // pred_fallthru
          _
      $region48: #{tpu_custom_call.1} parent=5 // pred_fallthru
        _
      %p305 = scmp.le.s32.totalorder 1, %s21
      %p306 = scmp.lt.s32.totalorder %s21, 3
      %p307 = pnand %p305, %p306
      %p308 = pneg %p307
      // Predicated region
      $region53: #{tpu_custom_call.1} parent=5 // pred_check
        _
      $region54: #{tpu_custom_call.1} parent=5 // pred_check_branch
        %310 = sbr.rel (%p307) target = $region56
      $region55: #{tpu_custom_call.1} parent=5 // pred_region
        %s311 = ssub.s32 %s21, 1
        %s312 = sand.u32 %s34, 1
        %s313 = scalar_lea.sflag [#allocation3], %s312
        %s314 = sand.u32 %s34, 1
        %s315 = smul.addr %s314, 64
        %s316 = scalar_lea.vmem [#allocation2], %s315
        // Predicated region
        $region57: #{tpu_custom_call.1} parent=55 // pred_check
          %p317 = pneg %p47
        $region58: #{tpu_custom_call.1} parent=55 // pred_check_branch
          %319 = sbr.rel (%p317) target = $region60
        $region59: #{tpu_custom_call.1} parent=55 // pred_region
          %320 = dma.done %s313, 1024
        $region60: #{tpu_custom_call.1} parent=55 // pred_fallthru
          _
        %s321 = sand.u32 %s34, 1
        %s322 = scalar_lea.sflag [#allocation3], %s321
        %s323 = sand.u32 %s34, 1
        %s324 = smul.addr %s323, 64
        %s325 = scalar_lea.vmem [#allocation2], %s324
        %p326 = pneg %p47
        %p327 = pneg %p44
        %p328 = pneg %p68
        %p329 = pneg %p65
        %p330 = pneg %p89
        %p331 = pneg %p86
        %p332 = pneg %p110
        %p333 = pneg %p107
        %p334 = pneg %p131
        %p335 = pneg %p128
        %p336 = pneg %p152
        %p337 = pneg %p149
        %p338 = pneg %p173
        %p339 = pneg %p170
        %p340 = pneg %p194
        %p341 = pneg %p191
        %p342 = pneg %p215
        %p343 = pneg %p212
        %p344 = pneg %p241
        %p345 = pneg %p238
        %s346 = sand.u32 %s228, 1
        %s347 = scalar_lea.sflag [#allocation4], %s346
        %s348 = sand.u32 %s228, 1
        %s349 = smul.addr %s348, 32
        %s350 = scalar_lea.vmem [#allocation5], %s349
        %v352 = vld [vmem:[%s316] sm:$0xff]
        %v353 = vld [vmem:[%s316 + $0x8] sm:$0xff]
        %v354 = vld [vmem:[%s316 + $0x10] sm:$0xff]
        %v355 = vld [vmem:[%s316 + $0x18] sm:$0xff]
        %v356 = vld [vmem:[%s316 + $0x20] sm:$0xff]
        %v357 = vld [vmem:[%s316 + $0x28] sm:$0xff]
        %v358 = vld [vmem:[%s316 + $0x30] sm:$0xff]
        %v359 = vld [vmem:[%s316 + $0x38] sm:$0xff]
        %v360 = vpack.c.bf16 %v353, %v352
        %v361 = vpack.c.bf16 %v355, %v354
        %v362 = vpack.c.bf16 %v357, %v356
        %v363 = vpack.c.bf16 %v359, %v358
        %v364 = vld [vmem:[%s1] sm:$0xf]
        %v365 = vld [vmem:[%s1 + $0x4] sm:$0xf]
        %v366 = vld [vmem:[%s2] sm:$0x1]
        %v368 = vlaneseq
        %v369 = vshrl.u32 %v368, 7
        %v370 = vsub.s32 0, %v369
        %v371 = vrot.slane %v366, %v370
        %v375 = vunpack.c.l.b16 %v364
        %v376 = vunpack.c.l.b16 %v365
        %v377 = vpack.c.b16 %v376, %v375
        %vm379 = vcmask 130048
        %v381 = vsel %vm379, %v360, 0
        %v384 = vsel %vm379, %v361, 0
        %v387 = vsel %vm379, %v362, 0
        %v390 = vsel %vm379, %v363, 0
        %392 = vmatprep.subr.bf16.mxu0 0
        %393 = vmatpush1.bf16.msra.mxu0 %v377
        %394 = vmatprep.subr.bf16.mxu0 0
        %395 = vmatpush1.bf16.msra.mxu0 0
        %396 = vmatprep.subr.bf16.mxu0 0
        %397 = vmatpush1.bf16.msra.mxu0 0
        %398 = vmatprep.subr.bf16.mxu0 0
        %399 = vmatpush1.bf16.msra.mxu0 0
        %400 = vmatprep.subr.bf16.mxu0 0
        %401 = vmatpush1.bf16.msra.mxu0 0
        %402 = vmatprep.subr.bf16.mxu0 0
        %403 = vmatpush1.bf16.msra.mxu0 0
        %404 = vmatprep.subr.bf16.mxu0 0
        %405 = vmatpush1.bf16.msra.mxu0 0
        %406 = vmatprep.subr.bf16.mxu0 0
        %407 = vmatpush1.bf16.msra.mxu0 0
        %408 = vmatprep.subr.bf16.mxu0 0
        %409 = vmatpush1.bf16.msra.mxu0 0
        %410 = vmatprep.subr.bf16.mxu0 0
        %411 = vmatpush1.bf16.msra.mxu0 0
        %412 = vmatprep.subr.bf16.mxu0 0
        %413 = vmatpush1.bf16.msra.mxu0 0
        %414 = vmatprep.subr.bf16.mxu0 0
        %415 = vmatpush1.bf16.msra.mxu0 0
        %416 = vmatprep.subr.bf16.mxu0 0
        %417 = vmatpush1.bf16.msra.mxu0 0
        %418 = vmatprep.subr.bf16.mxu0 0
        %419 = vmatpush1.bf16.msra.mxu0 0
        %420 = vmatprep.subr.bf16.mxu0 0
        %421 = vmatpush1.bf16.msra.mxu0 0
        %422 = vmatprep.subr.bf16.mxu0 0
        %423 = vmatpush1.bf16.msra.mxu0 0
        %424 = vmatprep.mubr.bf16.mxu0 0
        %425 = vmatmul.mubr.bf16.gmra.mrb[0].mxu0 %v381
        %v426 = vpop.f32.mrb[0].mxu0
        %v427 = vadd.f32 %v371, %v426
        %v428 = vpop.f32.mrb[0].mxu0
        %v429 = vpop.f32.mrb[0].mxu0
        %v430 = vadd.f32 %v371, %v429
        %v431 = vpop.f32.mrb[0].mxu0
        %432 = vmatprep.mubr.bf16.mxu0 0
        %433 = vmatmul.mubr.bf16.gmra.mrb[0].mxu0 %v384
        %v434 = vpop.f32.mrb[0].mxu0
        %v435 = vadd.f32 %v371, %v434
        %v436 = vpop.f32.mrb[0].mxu0
        %v437 = vpop.f32.mrb[0].mxu0
        %v438 = vadd.f32 %v371, %v437
        %v439 = vpop.f32.mrb[0].mxu0
        %440 = vmatprep.mubr.bf16.mxu0 0
        %441 = vmatmul.mubr.bf16.gmra.mrb[0].mxu0 %v387
        %v442 = vpop.f32.mrb[0].mxu0
        %v443 = vadd.f32 %v371, %v442
        %v444 = vpop.f32.mrb[0].mxu0
        %v445 = vpop.f32.mrb[0].mxu0
        %v446 = vadd.f32 %v371, %v445
        %v447 = vpop.f32.mrb[0].mxu0
        %448 = vmatprep.mubr.bf16.mxu0 0
        %449 = vmatmul.mubr.bf16.gmra.mrb[0].mxu0 %v390
        %v450 = vpop.f32.mrb[0].mxu0
        %v451 = vadd.f32 %v371, %v450
        %v452 = vpop.f32.mrb[0].mxu0
        %v453 = vpop.f32.mrb[0].mxu0
        %v454 = vadd.f32 %v371, %v453
        %v455 = vpop.f32.mrb[0].mxu0
        %456 = vdwg.mxu0
        %v457 = vmax.f32 %v427, 0.0
        %v458 = vmax.f32 %v430, 0.0
        %v459 = vmax.f32 %v435, 0.0
        %v460 = vmax.f32 %v438, 0.0
        %v461 = vmax.f32 %v443, 0.0
        %v462 = vmax.f32 %v446, 0.0
        %v463 = vmax.f32 %v451, 0.0
        %v464 = vmax.f32 %v454, 0.0
        %v465 = vpack.c.bf16 %v457, %v457
        %v466 = vpack.c.bf16 %v458, %v458
        %v467 = vpack.c.bf16 %v459, %v459
        %v468 = vpack.c.bf16 %v460, %v460
        %v469 = vpack.c.bf16 %v461, %v461
        %v470 = vpack.c.bf16 %v462, %v462
        %v471 = vpack.c.bf16 %v463, %v463
        %v472 = vpack.c.bf16 %v464, %v464
        %v474 = vshrl.u32 %v465, 16
        %v476 = vrot.slane %v474, 7
        %v477 = vshll.u32 %v465, 16
        %v479 = vor.u32 %v476, %v477
        %v481 = vshrl.u32 %v466, 16
        %v483 = vrot.slane %v481, 7
        %v484 = vshll.u32 %v466, 16
        %v486 = vor.u32 %v483, %v484
        %v488 = vshrl.u32 %v467, 16
        %v490 = vrot.slane %v488, 7
        %v491 = vshll.u32 %v467, 16
        %v493 = vor.u32 %v490, %v491
        %v495 = vshrl.u32 %v468, 16
        %v497 = vrot.slane %v495, 7
        %v498 = vshll.u32 %v468, 16
        %v500 = vor.u32 %v497, %v498
        %v502 = vshrl.u32 %v469, 16
        %v504 = vrot.slane %v502, 7
        %v505 = vshll.u32 %v469, 16
        %v507 = vor.u32 %v504, %v505
        %v509 = vshrl.u32 %v470, 16
        %v511 = vrot.slane %v509, 7
        %v512 = vshll.u32 %v470, 16
        %v514 = vor.u32 %v511, %v512
        %v516 = vshrl.u32 %v471, 16
        %v518 = vrot.slane %v516, 7
        %v519 = vshll.u32 %v471, 16
        %v521 = vor.u32 %v518, %v519
        %v523 = vshrl.u32 %v472, 16
        %v525 = vrot.slane %v523, 7
        %v526 = vshll.u32 %v472, 16
        %v528 = vor.u32 %v525, %v526
        %vm537 = vcmask 1040384
        %vm538 = vsmask.f32 256
        %vm539 = vmand %vm537, %vm538
        %v540 = vsel %vm539, 0, %v479
        %v541 = vsel %vm539, 0, %v486
        %v542 = vsel %vm539, 0, %v493
        %v543 = vsel %vm539, 0, %v500
        %v544 = vsel %vm539, 0, %v507
        %v545 = vsel %vm539, 0, %v514
        %v546 = vsel %vm539, 0, %v521
        %v547 = vsel %vm539, 0, %v528
        %v548 = vrot.slane %v477, 1
        %v549 = vor.u32 %v474, %v548
        %v550 = vrot.slane %v484, 1
        %v551 = vor.u32 %v481, %v550
        %v552 = vrot.slane %v491, 1
        %v553 = vor.u32 %v488, %v552
        %v554 = vrot.slane %v498, 1
        %v555 = vor.u32 %v495, %v554
        %v556 = vrot.slane %v505, 1
        %v557 = vor.u32 %v502, %v556
        %v558 = vrot.slane %v512, 1
        %v559 = vor.u32 %v509, %v558
        %v560 = vrot.slane %v519, 1
        %v561 = vor.u32 %v516, %v560
        %v562 = vrot.slane %v526, 1
        %v563 = vor.u32 %v523, %v562
        %vm572 = vcmask 1043456
        %vm573 = vsmask.f32 3328
        %vm574 = vmand %vm572, %vm573
        %v575 = vsel %vm574, %v549, 0
        %v576 = vsel %vm574, %v551, 0
        %v577 = vsel %vm574, %v553, 0
        %v578 = vsel %vm574, %v555, 0
        %v579 = vsel %vm574, %v557, 0
        %v580 = vsel %vm574, %v559, 0
        %v581 = vsel %vm574, %v561, 0
        %v582 = vsel %vm574, %v563, 0
        %591 = vrot.lane.b32.xlu0 %v465, 4
        %v592 = vpop.permute.xlu0 %591
        %593 = vrot.lane.b32.xlu0 %v466, 4
        %v594 = vpop.permute.xlu0 %593
        %595 = vrot.lane.b32.xlu0 %v467, 4
        %v596 = vpop.permute.xlu0 %595
        %597 = vrot.lane.b32.xlu0 %v468, 4
        %v598 = vpop.permute.xlu0 %597
        %599 = vrot.lane.b32.xlu0 %v469, 4
        %v600 = vpop.permute.xlu0 %599
        %601 = vrot.lane.b32.xlu0 %v470, 4
        %v602 = vpop.permute.xlu0 %601
        %603 = vrot.lane.b32.xlu0 %v471, 4
        %v604 = vpop.permute.xlu0 %603
        %605 = vrot.lane.b32.xlu0 %v472, 4
        %v606 = vpop.permute.xlu0 %605
        %615 = vrot.lane.b32.xlu0 %v575, 8
        %v616 = vpop.permute.xlu0 %615
        %617 = vrot.lane.b32.xlu0 %v576, 8
        %v618 = vpop.permute.xlu0 %617
        %619 = vrot.lane.b32.xlu0 %v577, 8
        %v620 = vpop.permute.xlu0 %619
        %621 = vrot.lane.b32.xlu0 %v578, 8
        %v622 = vpop.permute.xlu0 %621
        %623 = vrot.lane.b32.xlu0 %v579, 8
        %v624 = vpop.permute.xlu0 %623
        %625 = vrot.lane.b32.xlu0 %v580, 8
        %v626 = vpop.permute.xlu0 %625
        %627 = vrot.lane.b32.xlu0 %v581, 8
        %v628 = vpop.permute.xlu0 %627
        %629 = vrot.lane.b32.xlu0 %v582, 8
        %v630 = vpop.permute.xlu0 %629
        %vm631 = vcmask 31744
        %v634 = vsel %vm631, %v540, %v592
        %v637 = vsel %vm631, %v541, %v594
        %v640 = vsel %vm631, %v542, %v596
        %v643 = vsel %vm631, %v543, %v598
        %v646 = vsel %vm631, %v544, %v600
        %v649 = vsel %vm631, %v545, %v602
        %v652 = vsel %vm631, %v546, %v604
        %v655 = vsel %vm631, %v547, %v606
        %vm656 = vcmask 64512
        %v658 = vsel %vm656, %v634, %v616
        %v660 = vsel %vm656, %v637, %v618
        %v662 = vsel %vm656, %v640, %v620
        %v664 = vsel %vm656, %v643, %v622
        %v666 = vsel %vm656, %v646, %v624
        %v668 = vsel %vm656, %v649, %v626
        %v670 = vsel %vm656, %v652, %v628
        %v672 = vsel %vm656, %v655, %v630
        %s673 = scalar_lea.vmem %s3, 8
        %v674 = vld [vmem:[%s673] sm:$0xf]
        %v675 = vld [vmem:[%s673 + $0x4] sm:$0x3]
        %v684 = vunpack.c.l.b16 %v658
        %v685 = vunpack.c.l.b16 %v660
        %v686 = vunpack.c.l.b16 %v662
        %v687 = vunpack.c.l.b16 %v664
        %v688 = vunpack.c.l.b16 %v666
        %v689 = vunpack.c.l.b16 %v668
        %v690 = vunpack.c.l.b16 %v670
        %v691 = vunpack.c.l.b16 %v672
        %v692 = vpack.c.b16 %v685, %v684
        %v693 = vpack.c.b16 %v687, %v686
        %v694 = vpack.c.b16 %v689, %v688
        %v695 = vpack.c.b16 %v691, %v690
        %v698 = vunpack.c.l.b16 %v674
        %v699 = vunpack.c.l.b16 %v675
        %v700 = vpack.c.b16 %v699, %v698
        %vm701 = vcmask 97280
        %v703 = vsel %vm701, %v692, 0
        %v706 = vsel %vm701, %v693, 0
        %v709 = vsel %vm701, %v694, 0
        %v712 = vsel %vm701, %v695, 0
        %vm714 = vcmask 1045504
        %v716 = vsel %vm714, %v700, 0
        %718 = vmatprep.subr.bf16.mxu0 0
        %719 = vmatpush1.bf16.msra.mxu0 %v716
        %720 = vmatprep.subr.bf16.mxu0 0
        %721 = vmatpush1.bf16.msra.mxu0 0
        %722 = vmatprep.subr.bf16.mxu0 0
        %723 = vmatpush1.bf16.msra.mxu0 0
        %724 = vmatprep.subr.bf16.mxu0 0
        %725 = vmatpush1.bf16.msra.mxu0 0
        %726 = vmatprep.subr.bf16.mxu0 0
        %727 = vmatpush1.bf16.msra.mxu0 0
        %728 = vmatprep.subr.bf16.mxu0 0
        %729 = vmatpush1.bf16.msra.mxu0 0
        %730 = vmatprep.subr.bf16.mxu0 0
        %731 = vmatpush1.bf16.msra.mxu0 0
        %732 = vmatprep.subr.bf16.mxu0 0
        %733 = vmatpush1.bf16.msra.mxu0 0
        %734 = vmatprep.subr.bf16.mxu0 0
        %735 = vmatpush1.bf16.msra.mxu0 0
        %736 = vmatprep.subr.bf16.mxu0 0
        %737 = vmatpush1.bf16.msra.mxu0 0
        %738 = vmatprep.subr.bf16.mxu0 0
        %739 = vmatpush1.bf16.msra.mxu0 0
        %740 = vmatprep.subr.bf16.mxu0 0
        %741 = vmatpush1.bf16.msra.mxu0 0
        %742 = vmatprep.subr.bf16.mxu0 0
        %743 = vmatpush1.bf16.msra.mxu0 0
        %744 = vmatprep.subr.bf16.mxu0 0
        %745 = vmatpush1.bf16.msra.mxu0 0
        %746 = vmatprep.subr.bf16.mxu0 0
        %747 = vmatpush1.bf16.msra.mxu0 0
        %748 = vmatprep.subr.bf16.mxu0 0
        %749 = vmatpush1.bf16.msra.mxu0 0
        %750 = vmatprep.mubr.bf16.mxu0 0
        %751 = vmatmul.mubr.bf16.gmra.mrb[0].mxu0 %v703
        %v752 = vpop.f32.mrb[0].mxu0
        %v753 = vadd.f32 0.0, %v752
        %v754 = vpop.f32.mrb[0].mxu0
        %v755 = vpop.f32.mrb[0].mxu0
        %v756 = vadd.f32 0.0, %v755
        %v757 = vpop.f32.mrb[0].mxu0
        %758 = vmatprep.mubr.bf16.mxu0 0
        %759 = vmatmul.mubr.bf16.gmra.mrb[0].mxu0 %v706
        %v760 = vpop.f32.mrb[0].mxu0
        %v761 = vadd.f32 0.0, %v760
        %v762 = vpop.f32.mrb[0].mxu0
        %v763 = vpop.f32.mrb[0].mxu0
        %v764 = vadd.f32 0.0, %v763
        %v765 = vpop.f32.mrb[0].mxu0
        %766 = vmatprep.mubr.bf16.mxu0 0
        %767 = vmatmul.mubr.bf16.gmra.mrb[0].mxu0 %v709
        %v768 = vpop.f32.mrb[0].mxu0
        %v769 = vadd.f32 0.0, %v768
        %v770 = vpop.f32.mrb[0].mxu0
        %v771 = vpop.f32.mrb[0].mxu0
        %v772 = vadd.f32 0.0, %v771
        %v773 = vpop.f32.mrb[0].mxu0
        %774 = vmatprep.mubr.bf16.mxu0 0
        %775 = vmatmul.mubr.bf16.gmra.mrb[0].mxu0 %v712
        %v776 = vpop.f32.mrb[0].mxu0
        %v777 = vadd.f32 0.0, %v776
        %v778 = vpop.f32.mrb[0].mxu0
        %v779 = vpop.f32.mrb[0].mxu0
        %v780 = vadd.f32 0.0, %v779
        %v781 = vpop.f32.mrb[0].mxu0
        %782 = vdwg.mxu0
        %v783 = vld [vmem:[%s3] sm:$0xf]
        %v784 = vld [vmem:[%s3 + $0x4] sm:$0x3]
        %v785 = vpack.c.b16 %v690, %v690
        %v788 = vunpack.c.l.b16 %v783
        %v789 = vunpack.c.l.b16 %v784
        %v790 = vpack.c.b16 %v789, %v788
        %v792 = vsel %vm701, %v785, 0
        %v795 = vsel %vm714, %v790, 0
        %797 = vmatprep.subr.bf16.mxu0 0
        %798 = vmatpush1.bf16.msra.mxu0 %v795
        %799 = vmatprep.subr.bf16.mxu0 0
        %800 = vmatpush1.bf16.msra.mxu0 0
        %801 = vmatprep.subr.bf16.mxu0 0
        %802 = vmatpush1.bf16.msra.mxu0 0
        %803 = vmatprep.subr.bf16.mxu0 0
        %804 = vmatpush1.bf16.msra.mxu0 0
        %805 = vmatprep.subr.bf16.mxu0 0
        %806 = vmatpush1.bf16.msra.mxu0 0
        %807 = vmatprep.subr.bf16.mxu0 0
        %808 = vmatpush1.bf16.msra.mxu0 0
        %809 = vmatprep.subr.bf16.mxu0 0
        %810 = vmatpush1.bf16.msra.mxu0 0
        %811 = vmatprep.subr.bf16.mxu0 0
        %812 = vmatpush1.bf16.msra.mxu0 0
        %813 = vmatprep.subr.bf16.mxu0 0
        %814 = vmatpush1.bf16.msra.mxu0 0
        %815 = vmatprep.subr.bf16.mxu0 0
        %816 = vmatpush1.bf16.msra.mxu0 0
        %817 = vmatprep.subr.bf16.mxu0 0
        %818 = vmatpush1.bf16.msra.mxu0 0
        %819 = vmatprep.subr.bf16.mxu0 0
        %820 = vmatpush1.bf16.msra.mxu0 0
        %821 = vmatprep.subr.bf16.mxu0 0
        %822 = vmatpush1.bf16.msra.mxu0 0
        %823 = vmatprep.subr.bf16.mxu0 0
        %824 = vmatpush1.bf16.msra.mxu0 0
        %825 = vmatprep.subr.bf16.mxu0 0
        %826 = vmatpush1.bf16.msra.mxu0 0
        %827 = vmatprep.subr.bf16.mxu0 0
        %828 = vmatpush1.bf16.msra.mxu0 0
        %829 = vmatprep.mubr.bf16.mxu0 0
        %830 = vmatmul.mubr.bf16.gmra.mrb[0].mxu0 %v703
        %v831 = vpop.f32.mrb[0].mxu0
        %v832 = vadd.f32 0.0, %v831
        %v833 = vpop.f32.mrb[0].mxu0
        %v834 = vpop.f32.mrb[0].mxu0
        %v835 = vadd.f32 0.0, %v834
        %v836 = vpop.f32.mrb[0].mxu0
        %837 = vmatprep.mubr.bf16.mxu0 0
        %838 = vmatmul.mubr.bf16.gmra.mrb[0].mxu0 %v706
        %v839 = vpop.f32.mrb[0].mxu0
        %v840 = vadd.f32 0.0, %v839
        %v841 = vpop.f32.mrb[0].mxu0
        %v842 = vpop.f32.mrb[0].mxu0
        %v843 = vadd.f32 0.0, %v842
        %v844 = vpop.f32.mrb[0].mxu0
        %845 = vmatprep.mubr.bf16.mxu0 0
        %846 = vmatmul.mubr.bf16.gmra.mrb[0].mxu0 %v709
        %v847 = vpop.f32.mrb[0].mxu0
        %v848 = vadd.f32 0.0, %v847
        %v849 = vpop.f32.mrb[0].mxu0
        %v850 = vpop.f32.mrb[0].mxu0
        %v851 = vadd.f32 0.0, %v850
        %v852 = vpop.f32.mrb[0].mxu0
        %853 = vmatprep.mubr.bf16.mxu0 0
        %854 = vmatmul.mubr.bf16.gmra.mrb[0].mxu0 %v792
        %v855 = vpop.f32.mrb[0].mxu0
        %v856 = vadd.f32 0.0, %v855
        %v857 = vpop.f32.mrb[0].mxu0
        %v858 = vpop.f32.mrb[0].mxu0
        %v859 = vpop.f32.mrb[0].mxu0
        %860 = vdwg.mxu0
        %s861 = scalar_lea.vmem %s3, 16
        %v862 = vld [vmem:[%s861] sm:$0xf]
        %v863 = vld [vmem:[%s861 + $0x4] sm:$0x3]
        %v864 = vpack.c.b16 %v686, %v685
        %v865 = vpack.c.b16 %v688, %v687
        %v866 = vpack.c.b16 %v690, %v689
        %v867 = vpack.c.b16 %v691, %v691
        %v870 = vunpack.c.l.b16 %v862
        %v871 = vunpack.c.l.b16 %v863
        %v872 = vpack.c.b16 %v871, %v870
        %v874 = vsel %vm701, %v864, 0
        %v877 = vsel %vm701, %v865, 0
        %v880 = vsel %vm701, %v866, 0
        %v883 = vsel %vm701, %v867, 0
        %v886 = vsel %vm714, %v872, 0
        %888 = vmatprep.subr.bf16.mxu0 0
        %889 = vmatpush1.bf16.msra.mxu0 %v886
        %890 = vmatprep.subr.bf16.mxu0 0
        %891 = vmatpush1.bf16.msra.mxu0 0
        %892 = vmatprep.subr.bf16.mxu0 0
        %893 = vmatpush1.bf16.msra.mxu0 0
        %894 = vmatprep.subr.bf16.mxu0 0
        %895 = vmatpush1.bf16.msra.mxu0 0
        %896 = vmatprep.subr.bf16.mxu0 0
        %897 = vmatpush1.bf16.msra.mxu0 0
        %898 = vmatprep.subr.bf16.mxu0 0
        %899 = vmatpush1.bf16.msra.mxu0 0
        %900 = vmatprep.subr.bf16.mxu0 0
        %901 = vmatpush1.bf16.msra.mxu0 0
        %902 = vmatprep.subr.bf16.mxu0 0
        %903 = vmatpush1.bf16.msra.mxu0 0
        %904 = vmatprep.subr.bf16.mxu0 0
        %905 = vmatpush1.bf16.msra.mxu0 0
        %906 = vmatprep.subr.bf16.mxu0 0
        %907 = vmatpush1.bf16.msra.mxu0 0
        %908 = vmatprep.subr.bf16.mxu0 0
        %909 = vmatpush1.bf16.msra.mxu0 0
        %910 = vmatprep.subr.bf16.mxu0 0
        %911 = vmatpush1.bf16.msra.mxu0 0
        %912 = vmatprep.subr.bf16.mxu0 0
        %913 = vmatpush1.bf16.msra.mxu0 0
        %914 = vmatprep.subr.bf16.mxu0 0
        %915 = vmatpush1.bf16.msra.mxu0 0
        %916 = vmatprep.subr.bf16.mxu0 0
        %917 = vmatpush1.bf16.msra.mxu0 0
        %918 = vmatprep.subr.bf16.mxu0 0
        %919 = vmatpush1.bf16.msra.mxu0 0
        %920 = vmatprep.mubr.bf16.mxu0 0
        %921 = vmatmul.mubr.bf16.gmra.mrb[0].mxu0 %v874
        %v922 = vpop.f32.mrb[0].mxu0
        %v923 = vadd.f32 0.0, %v922
        %v924 = vpop.f32.mrb[0].mxu0
        %v925 = vpop.f32.mrb[0].mxu0
        %v926 = vadd.f32 0.0, %v925
        %v927 = vpop.f32.mrb[0].mxu0
        %928 = vmatprep.mubr.bf16.mxu0 0
        %929 = vmatmul.mubr.bf16.gmra.mrb[0].mxu0 %v877
        %v930 = vpop.f32.mrb[0].mxu0
        %v931 = vadd.f32 0.0, %v930
        %v932 = vpop.f32.mrb[0].mxu0
        %v933 = vpop.f32.mrb[0].mxu0
        %v934 = vadd.f32 0.0, %v933
        %v935 = vpop.f32.mrb[0].mxu0
        %936 = vmatprep.mubr.bf16.mxu0 0
        %937 = vmatmul.mubr.bf16.gmra.mrb[0].mxu0 %v880
        %v938 = vpop.f32.mrb[0].mxu0
        %v939 = vadd.f32 0.0, %v938
        %v940 = vpop.f32.mrb[0].mxu0
        %v941 = vpop.f32.mrb[0].mxu0
        %v942 = vadd.f32 0.0, %v941
        %v943 = vpop.f32.mrb[0].mxu0
        %944 = vmatprep.mubr.bf16.mxu0 0
        %945 = vmatmul.mubr.bf16.gmra.mrb[0].mxu0 %v883
        %v946 = vpop.f32.mrb[0].mxu0
        %v947 = vadd.f32 0.0, %v946
        %v948 = vpop.f32.mrb[0].mxu0
        %v949 = vpop.f32.mrb[0].mxu0
        %v950 = vpop.f32.mrb[0].mxu0
        %951 = vdwg.mxu0
        %v952 = vadd.f32 %v753, 0.0
        %v953 = vadd.f32 %v756, %v832
        %v954 = vadd.f32 %v761, %v835
        %v955 = vadd.f32 %v764, %v840
        %v956 = vadd.f32 %v769, %v843
        %v957 = vadd.f32 %v772, %v848
        %v958 = vadd.f32 %v777, %v851
        %v959 = vadd.f32 %v780, %v856
        %v960 = vadd.f32 %v952, %v923
        %v961 = vadd.f32 %v953, %v926
        %v962 = vadd.f32 %v954, %v931
        %v963 = vadd.f32 %v955, %v934
        %v964 = vadd.f32 %v956, %v939
        %v965 = vadd.f32 %v957, %v942
        %v966 = vadd.f32 %v958, %v947
        %v967 = vadd.f32 %v959, 0.0
        %v968 = vld [vmem:[%s4] sm:$0x1]
        %v970 = vlaneseq
        %v971 = vshrl.u32 %v970, 7
        %v972 = vsub.s32 0, %v971
        %v973 = vrot.slane %v968, %v972
        %v975 = vadd.f32 %v960, %v973
        %v976 = vadd.f32 %v961, %v973
        %v977 = vadd.f32 %v962, %v973
        %v978 = vadd.f32 %v963, %v973
        %v979 = vadd.f32 %v964, %v973
        %v980 = vadd.f32 %v965, %v973
        %v981 = vadd.f32 %v966, %v973
        %v982 = vadd.f32 %v967, %v973
        %v983 = vmax.f32 %v975, 0.0
        %v984 = vmax.f32 %v976, 0.0
        %v985 = vmax.f32 %v977, 0.0
        %v986 = vmax.f32 %v978, 0.0
        %v987 = vmax.f32 %v979, 0.0
        %v988 = vmax.f32 %v980, 0.0
        %v989 = vmax.f32 %v981, 0.0
        %v990 = vmax.f32 %v982, 0.0
        %v991 = vpack.c.bf16 %v983, %v983
        %v992 = vpack.c.bf16 %v984, %v984
        %v993 = vpack.c.bf16 %v985, %v985
        %v994 = vpack.c.bf16 %v986, %v986
        %v995 = vpack.c.bf16 %v987, %v987
        %v996 = vpack.c.bf16 %v988, %v988
        %v997 = vpack.c.bf16 %v989, %v989
        %v998 = vpack.c.bf16 %v990, %v990
        %v1000 = vshrl.u32 %v991, 16
        %v1002 = vrot.slane %v1000, 7
        %v1003 = vshll.u32 %v991, 16
        %v1005 = vor.u32 %v1002, %v1003
        %v1007 = vshrl.u32 %v992, 16
        %v1009 = vrot.slane %v1007, 7
        %v1010 = vshll.u32 %v992, 16
        %v1012 = vor.u32 %v1009, %v1010
        %v1014 = vshrl.u32 %v993, 16
        %v1016 = vrot.slane %v1014, 7
        %v1017 = vshll.u32 %v993, 16
        %v1019 = vor.u32 %v1016, %v1017
        %v1021 = vshrl.u32 %v994, 16
        %v1023 = vrot.slane %v1021, 7
        %v1024 = vshll.u32 %v994, 16
        %v1026 = vor.u32 %v1023, %v1024
        %v1028 = vshrl.u32 %v995, 16
        %v1030 = vrot.slane %v1028, 7
        %v1031 = vshll.u32 %v995, 16
        %v1033 = vor.u32 %v1030, %v1031
        %v1035 = vshrl.u32 %v996, 16
        %v1037 = vrot.slane %v1035, 7
        %v1038 = vshll.u32 %v996, 16
        %v1040 = vor.u32 %v1037, %v1038
        %v1042 = vshrl.u32 %v997, 16
        %v1044 = vrot.slane %v1042, 7
        %v1045 = vshll.u32 %v997, 16
        %v1047 = vor.u32 %v1044, %v1045
        %v1049 = vshrl.u32 %v998, 16
        %v1051 = vrot.slane %v1049, 7
        %v1052 = vshll.u32 %v998, 16
        %v1054 = vor.u32 %v1051, %v1052
        %v1063 = vsel %vm539, 0, %v1005
        %v1064 = vsel %vm539, 0, %v1012
        %v1065 = vsel %vm539, 0, %v1019
        %v1066 = vsel %vm539, 0, %v1026
        %v1067 = vsel %vm539, 0, %v1033
        %v1068 = vsel %vm539, 0, %v1040
        %v1069 = vsel %vm539, 0, %v1047
        %v1070 = vsel %vm539, 0, %v1054
        %v1071 = vrot.slane %v1003, 1
        %v1072 = vor.u32 %v1000, %v1071
        %v1073 = vrot.slane %v1010, 1
        %v1074 = vor.u32 %v1007, %v1073
        %v1075 = vrot.slane %v1017, 1
        %v1076 = vor.u32 %v1014, %v1075
        %v1077 = vrot.slane %v1024, 1
        %v1078 = vor.u32 %v1021, %v1077
        %v1079 = vrot.slane %v1031, 1
        %v1080 = vor.u32 %v1028, %v1079
        %v1081 = vrot.slane %v1038, 1
        %v1082 = vor.u32 %v1035, %v1081
        %v1083 = vrot.slane %v1045, 1
        %v1084 = vor.u32 %v1042, %v1083
        %v1085 = vrot.slane %v1052, 1
        %v1086 = vor.u32 %v1049, %v1085
        %v1095 = vsel %vm574, %v1072, 0
        %v1096 = vsel %vm574, %v1074, 0
        %v1097 = vsel %vm574, %v1076, 0
        %v1098 = vsel %vm574, %v1078, 0
        %v1099 = vsel %vm574, %v1080, 0
        %v1100 = vsel %vm574, %v1082, 0
        %v1101 = vsel %vm574, %v1084, 0
        %v1102 = vsel %vm574, %v1086, 0
        %1111 = vrot.lane.b32.xlu0 %v991, 4
        %v1112 = vpop.permute.xlu0 %1111
        %1113 = vrot.lane.b32.xlu0 %v992, 4
        %v1114 = vpop.permute.xlu0 %1113
        %1115 = vrot.lane.b32.xlu0 %v993, 4
        %v1116 = vpop.permute.xlu0 %1115
        %1117 = vrot.lane.b32.xlu0 %v994, 4
        %v1118 = vpop.permute.xlu0 %1117
        %1119 = vrot.lane.b32.xlu0 %v995, 4
        %v1120 = vpop.permute.xlu0 %1119
        %1121 = vrot.lane.b32.xlu0 %v996, 4
        %v1122 = vpop.permute.xlu0 %1121
        %1123 = vrot.lane.b32.xlu0 %v997, 4
        %v1124 = vpop.permute.xlu0 %1123
        %1125 = vrot.lane.b32.xlu0 %v998, 4
        %v1126 = vpop.permute.xlu0 %1125
        %1135 = vrot.lane.b32.xlu0 %v1095, 8
        %v1136 = vpop.permute.xlu0 %1135
        %1137 = vrot.lane.b32.xlu0 %v1096, 8
        %v1138 = vpop.permute.xlu0 %1137
        %1139 = vrot.lane.b32.xlu0 %v1097, 8
        %v1140 = vpop.permute.xlu0 %1139
        %1141 = vrot.lane.b32.xlu0 %v1098, 8
        %v1142 = vpop.permute.xlu0 %1141
        %1143 = vrot.lane.b32.xlu0 %v1099, 8
        %v1144 = vpop.permute.xlu0 %1143
        %1145 = vrot.lane.b32.xlu0 %v1100, 8
        %v1146 = vpop.permute.xlu0 %1145
        %1147 = vrot.lane.b32.xlu0 %v1101, 8
        %v1148 = vpop.permute.xlu0 %1147
        %1149 = vrot.lane.b32.xlu0 %v1102, 8
        %v1150 = vpop.permute.xlu0 %1149
        %v1153 = vsel %vm631, %v1063, %v1112
        %v1156 = vsel %vm631, %v1064, %v1114
        %v1159 = vsel %vm631, %v1065, %v1116
        %v1162 = vsel %vm631, %v1066, %v1118
        %v1165 = vsel %vm631, %v1067, %v1120
        %v1168 = vsel %vm631, %v1068, %v1122
        %v1171 = vsel %vm631, %v1069, %v1124
        %v1174 = vsel %vm631, %v1070, %v1126
        %v1176 = vsel %vm656, %v1153, %v1136
        %v1178 = vsel %vm656, %v1156, %v1138
        %v1180 = vsel %vm656, %v1159, %v1140
        %v1182 = vsel %vm656, %v1162, %v1142
        %v1184 = vsel %vm656, %v1165, %v1144
        %v1186 = vsel %vm656, %v1168, %v1146
        %v1188 = vsel %vm656, %v1171, %v1148
        %v1190 = vsel %vm656, %v1174, %v1150
        %s1191 = scalar_lea.vmem %s5, 8
        %v1192 = vld [vmem:[%s1191] sm:$0xf]
        %v1193 = vld [vmem:[%s1191 + $0x4] sm:$0x3]
        %v1202 = vunpack.c.l.b16 %v1176
        %v1203 = vunpack.c.l.b16 %v1178
        %v1204 = vunpack.c.l.b16 %v1180
        %v1205 = vunpack.c.l.b16 %v1182
        %v1206 = vunpack.c.l.b16 %v1184
        %v1207 = vunpack.c.l.b16 %v1186
        %v1208 = vunpack.c.l.b16 %v1188
        %v1209 = vunpack.c.l.b16 %v1190
        %v1210 = vpack.c.b16 %v1203, %v1202
        %v1211 = vpack.c.b16 %v1205, %v1204
        %v1212 = vpack.c.b16 %v1207, %v1206
        %v1213 = vpack.c.b16 %v1209, %v1208
        %v1216 = vunpack.c.l.b16 %v1192
        %v1217 = vunpack.c.l.b16 %v1193
        %v1218 = vpack.c.b16 %v1217, %v1216
        %v1220 = vsel %vm701, %v1210, 0
        %v1223 = vsel %vm701, %v1211, 0
        %v1226 = vsel %vm701, %v1212, 0
        %v1229 = vsel %vm701, %v1213, 0
        %v1232 = vsel %vm714, %v1218, 0
        %1234 = vmatprep.subr.bf16.mxu0 0
        %1235 = vmatpush1.bf16.msra.mxu0 %v1232
        %1236 = vmatprep.subr.bf16.mxu0 0
        %1237 = vmatpush1.bf16.msra.mxu0 0
        %1238 = vmatprep.subr.bf16.mxu0 0
        %1239 = vmatpush1.bf16.msra.mxu0 0
        %1240 = vmatprep.subr.bf16.mxu0 0
        %1241 = vmatpush1.bf16.msra.mxu0 0
        %1242 = vmatprep.subr.bf16.mxu0 0
        %1243 = vmatpush1.bf16.msra.mxu0 0
        %1244 = vmatprep.subr.bf16.mxu0 0
        %1245 = vmatpush1.bf16.msra.mxu0 0
        %1246 = vmatprep.subr.bf16.mxu0 0
        %1247 = vmatpush1.bf16.msra.mxu0 0
        %1248 = vmatprep.subr.bf16.mxu0 0
        %1249 = vmatpush1.bf16.msra.mxu0 0
        %1250 = vmatprep.subr.bf16.mxu0 0
        %1251 = vmatpush1.bf16.msra.mxu0 0
        %1252 = vmatprep.subr.bf16.mxu0 0
        %1253 = vmatpush1.bf16.msra.mxu0 0
        %1254 = vmatprep.subr.bf16.mxu0 0
        %1255 = vmatpush1.bf16.msra.mxu0 0
        %1256 = vmatprep.subr.bf16.mxu0 0
        %1257 = vmatpush1.bf16.msra.mxu0 0
        %1258 = vmatprep.subr.bf16.mxu0 0
        %1259 = vmatpush1.bf16.msra.mxu0 0
        %1260 = vmatprep.subr.bf16.mxu0 0
        %1261 = vmatpush1.bf16.msra.mxu0 0
        %1262 = vmatprep.subr.bf16.mxu0 0
        %1263 = vmatpush1.bf16.msra.mxu0 0
        %1264 = vmatprep.subr.bf16.mxu0 0
        %1265 = vmatpush1.bf16.msra.mxu0 0
        %1266 = vmatprep.mubr.bf16.mxu0 0
        %1267 = vmatmul.mubr.bf16.gmra.mrb[0].mxu0 %v1220
        %v1268 = vpop.f32.mrb[0].mxu0
        %v1269 = vadd.f32 0.0, %v1268
        %v1270 = vpop.f32.mrb[0].mxu0
        %v1271 = vpop.f32.mrb[0].mxu0
        %v1272 = vadd.f32 0.0, %v1271
        %v1273 = vpop.f32.mrb[0].mxu0
        %1274 = vmatprep.mubr.bf16.mxu0 0
        %1275 = vmatmul.mubr.bf16.gmra.mrb[0].mxu0 %v1223
        %v1276 = vpop.f32.mrb[0].mxu0
        %v1277 = vadd.f32 0.0, %v1276
        %v1278 = vpop.f32.mrb[0].mxu0
        %v1279 = vpop.f32.mrb[0].mxu0
        %v1280 = vadd.f32 0.0, %v1279
        %v1281 = vpop.f32.mrb[0].mxu0
        %1282 = vmatprep.mubr.bf16.mxu0 0
        %1283 = vmatmul.mubr.bf16.gmra.mrb[0].mxu0 %v1226
        %v1284 = vpop.f32.mrb[0].mxu0
        %v1285 = vadd.f32 0.0, %v1284
        %v1286 = vpop.f32.mrb[0].mxu0
        %v1287 = vpop.f32.mrb[0].mxu0
        %v1288 = vadd.f32 0.0, %v1287
        %v1289 = vpop.f32.mrb[0].mxu0
        %1290 = vmatprep.mubr.bf16.mxu0 0
        %1291 = vmatmul.mubr.bf16.gmra.mrb[0].mxu0 %v1229
        %v1292 = vpop.f32.mrb[0].mxu0
        %v1293 = vadd.f32 0.0, %v1292
        %v1294 = vpop.f32.mrb[0].mxu0
        %v1295 = vpop.f32.mrb[0].mxu0
        %v1296 = vadd.f32 0.0, %v1295
        %v1297 = vpop.f32.mrb[0].mxu0
        %1298 = vdwg.mxu0
        %v1299 = vld [vmem:[%s5] sm:$0xf]
        %v1300 = vld [vmem:[%s5 + $0x4] sm:$0x3]
        %v1301 = vpack.c.b16 %v1208, %v1208
        %v1304 = vunpack.c.l.b16 %v1299
        %v1305 = vunpack.c.l.b16 %v1300
        %v1306 = vpack.c.b16 %v1305, %v1304
        %v1308 = vsel %vm701, %v1301, 0
        %v1311 = vsel %vm714, %v1306, 0
        %1313 = vmatprep.subr.bf16.mxu0 0
        %1314 = vmatpush1.bf16.msra.mxu0 %v1311
        %1315 = vmatprep.subr.bf16.mxu0 0
        %1316 = vmatpush1.bf16.msra.mxu0 0
        %1317 = vmatprep.subr.bf16.mxu0 0
        %1318 = vmatpush1.bf16.msra.mxu0 0
        %1319 = vmatprep.subr.bf16.mxu0 0
        %1320 = vmatpush1.bf16.msra.mxu0 0
        %1321 = vmatprep.subr.bf16.mxu0 0
        %1322 = vmatpush1.bf16.msra.mxu0 0
        %1323 = vmatprep.subr.bf16.mxu0 0
        %1324 = vmatpush1.bf16.msra.mxu0 0
        %1325 = vmatprep.subr.bf16.mxu0 0
        %1326 = vmatpush1.bf16.msra.mxu0 0
        %1327 = vmatprep.subr.bf16.mxu0 0
        %1328 = vmatpush1.bf16.msra.mxu0 0
        %1329 = vmatprep.subr.bf16.mxu0 0
        %1330 = vmatpush1.bf16.msra.mxu0 0
        %1331 = vmatprep.subr.bf16.mxu0 0
        %1332 = vmatpush1.bf16.msra.mxu0 0
        %1333 = vmatprep.subr.bf16.mxu0 0
        %1334 = vmatpush1.bf16.msra.mxu0 0
        %1335 = vmatprep.subr.bf16.mxu0 0
        %1336 = vmatpush1.bf16.msra.mxu0 0
        %1337 = vmatprep.subr.bf16.mxu0 0
        %1338 = vmatpush1.bf16.msra.mxu0 0
        %1339 = vmatprep.subr.bf16.mxu0 0
        %1340 = vmatpush1.bf16.msra.mxu0 0
        %1341 = vmatprep.subr.bf16.mxu0 0
        %1342 = vmatpush1.bf16.msra.mxu0 0
        %1343 = vmatprep.subr.bf16.mxu0 0
        %1344 = vmatpush1.bf16.msra.mxu0 0
        %1345 = vmatprep.mubr.bf16.mxu0 0
        %1346 = vmatmul.mubr.bf16.gmra.mrb[0].mxu0 %v1220
        %v1347 = vpop.f32.mrb[0].mxu0
        %v1348 = vadd.f32 0.0, %v1347
        %v1349 = vpop.f32.mrb[0].mxu0
        %v1350 = vpop.f32.mrb[0].mxu0
        %v1351 = vadd.f32 0.0, %v1350
        %v1352 = vpop.f32.mrb[0].mxu0
        %1353 = vmatprep.mubr.bf16.mxu0 0
        %1354 = vmatmul.mubr.bf16.gmra.mrb[0].mxu0 %v1223
        %v1355 = vpop.f32.mrb[0].mxu0
        %v1356 = vadd.f32 0.0, %v1355
        %v1357 = vpop.f32.mrb[0].mxu0
        %v1358 = vpop.f32.mrb[0].mxu0
        %v1359 = vadd.f32 0.0, %v1358
        %v1360 = vpop.f32.mrb[0].mxu0
        %1361 = vmatprep.mubr.bf16.mxu0 0
        %1362 = vmatmul.mubr.bf16.gmra.mrb[0].mxu0 %v1226
        %v1363 = vpop.f32.mrb[0].mxu0
        %v1364 = vadd.f32 0.0, %v1363
        %v1365 = vpop.f32.mrb[0].mxu0
        %v1366 = vpop.f32.mrb[0].mxu0
        %v1367 = vadd.f32 0.0, %v1366
        %v1368 = vpop.f32.mrb[0].mxu0
        %1369 = vmatprep.mubr.bf16.mxu0 0
        %1370 = vmatmul.mubr.bf16.gmra.mrb[0].mxu0 %v1308
        %v1371 = vpop.f32.mrb[0].mxu0
        %v1372 = vadd.f32 0.0, %v1371
        %v1373 = vpop.f32.mrb[0].mxu0
        %v1374 = vpop.f32.mrb[0].mxu0
        %v1375 = vpop.f32.mrb[0].mxu0
        %1376 = vdwg.mxu0
        %s1377 = scalar_lea.vmem %s5, 16
        %v1378 = vld [vmem:[%s1377] sm:$0xf]
        %v1379 = vld [vmem:[%s1377 + $0x4] sm:$0x3]
        %v1380 = vpack.c.b16 %v1204, %v1203
        %v1381 = vpack.c.b16 %v1206, %v1205
        %v1382 = vpack.c.b16 %v1208, %v1207
        %v1383 = vpack.c.b16 %v1209, %v1209
        %v1386 = vunpack.c.l.b16 %v1378
        %v1387 = vunpack.c.l.b16 %v1379
        %v1388 = vpack.c.b16 %v1387, %v1386
        %v1390 = vsel %vm701, %v1380, 0
        %v1393 = vsel %vm701, %v1381, 0
        %v1396 = vsel %vm701, %v1382, 0
        %v1399 = vsel %vm701, %v1383, 0
        %v1402 = vsel %vm714, %v1388, 0
        %1404 = vmatprep.subr.bf16.mxu0 0
        %1405 = vmatpush1.bf16.msra.mxu0 %v1402
        %1406 = vmatprep.subr.bf16.mxu0 0
        %1407 = vmatpush1.bf16.msra.mxu0 0
        %1408 = vmatprep.subr.bf16.mxu0 0
        %1409 = vmatpush1.bf16.msra.mxu0 0
        %1410 = vmatprep.subr.bf16.mxu0 0
        %1411 = vmatpush1.bf16.msra.mxu0 0
        %1412 = vmatprep.subr.bf16.mxu0 0
        %1413 = vmatpush1.bf16.msra.mxu0 0
        %1414 = vmatprep.subr.bf16.mxu0 0
        %1415 = vmatpush1.bf16.msra.mxu0 0
        %1416 = vmatprep.subr.bf16.mxu0 0
        %1417 = vmatpush1.bf16.msra.mxu0 0
        %1418 = vmatprep.subr.bf16.mxu0 0
        %1419 = vmatpush1.bf16.msra.mxu0 0
        %1420 = vmatprep.subr.bf16.mxu0 0
        %1421 = vmatpush1.bf16.msra.mxu0 0
        %1422 = vmatprep.subr.bf16.mxu0 0
        %1423 = vmatpush1.bf16.msra.mxu0 0
        %1424 = vmatprep.subr.bf16.mxu0 0
        %1425 = vmatpush1.bf16.msra.mxu0 0
        %1426 = vmatprep.subr.bf16.mxu0 0
        %1427 = vmatpush1.bf16.msra.mxu0 0
        %1428 = vmatprep.subr.bf16.mxu0 0
        %1429 = vmatpush1.bf16.msra.mxu0 0
        %1430 = vmatprep.subr.bf16.mxu0 0
        %1431 = vmatpush1.bf16.msra.mxu0 0
        %1432 = vmatprep.subr.bf16.mxu0 0
        %1433 = vmatpush1.bf16.msra.mxu0 0
        %1434 = vmatprep.subr.bf16.mxu0 0
        %1435 = vmatpush1.bf16.msra.mxu0 0
        %1436 = vmatprep.mubr.bf16.mxu0 0
        %1437 = vmatmul.mubr.bf16.gmra.mrb[0].mxu0 %v1390
        %v1438 = vpop.f32.mrb[0].mxu0
        %v1439 = vadd.f32 0.0, %v1438
        %v1440 = vpop.f32.mrb[0].mxu0
        %v1441 = vpop.f32.mrb[0].mxu0
        %v1442 = vadd.f32 0.0, %v1441
        %v1443 = vpop.f32.mrb[0].mxu0
        %1444 = vmatprep.mubr.bf16.mxu0 0
        %1445 = vmatmul.mubr.bf16.gmra.mrb[0].mxu0 %v1393
        %v1446 = vpop.f32.mrb[0].mxu0
        %v1447 = vadd.f32 0.0, %v1446
        %v1448 = vpop.f32.mrb[0].mxu0
        %v1449 = vpop.f32.mrb[0].mxu0
        %v1450 = vadd.f32 0.0, %v1449
        %v1451 = vpop.f32.mrb[0].mxu0
        %1452 = vmatprep.mubr.bf16.mxu0 0
        %1453 = vmatmul.mubr.bf16.gmra.mrb[0].mxu0 %v1396
        %v1454 = vpop.f32.mrb[0].mxu0
        %v1455 = vadd.f32 0.0, %v1454
        %v1456 = vpop.f32.mrb[0].mxu0
        %v1457 = vpop.f32.mrb[0].mxu0
        %v1458 = vadd.f32 0.0, %v1457
        %v1459 = vpop.f32.mrb[0].mxu0
        %1460 = vmatprep.mubr.bf16.mxu0 0
        %1461 = vmatmul.mubr.bf16.gmra.mrb[0].mxu0 %v1399
        %v1462 = vpop.f32.mrb[0].mxu0
        %v1463 = vadd.f32 0.0, %v1462
        %v1464 = vpop.f32.mrb[0].mxu0
        %v1465 = vpop.f32.mrb[0].mxu0
        %v1466 = vpop.f32.mrb[0].mxu0
        %1467 = vdwg.mxu0
        %v1468 = vadd.f32 %v1269, 0.0
        %v1469 = vadd.f32 %v1272, %v1348
        %v1470 = vadd.f32 %v1277, %v1351
        %v1471 = vadd.f32 %v1280, %v1356
        %v1472 = vadd.f32 %v1285, %v1359
        %v1473 = vadd.f32 %v1288, %v1364
        %v1474 = vadd.f32 %v1293, %v1367
        %v1475 = vadd.f32 %v1296, %v1372
        %v1476 = vadd.f32 %v1468, %v1439
        %v1477 = vadd.f32 %v1469, %v1442
        %v1478 = vadd.f32 %v1470, %v1447
        %v1479 = vadd.f32 %v1471, %v1450
        %v1480 = vadd.f32 %v1472, %v1455
        %v1481 = vadd.f32 %v1473, %v1458
        %v1482 = vadd.f32 %v1474, %v1463
        %v1483 = vadd.f32 %v1475, 0.0
        %v1484 = vld [vmem:[%s6] sm:$0x1]
        %v1486 = vlaneseq
        %v1487 = vshrl.u32 %v1486, 7
        %v1488 = vsub.s32 0, %v1487
        %v1489 = vrot.slane %v1484, %v1488
        %v1491 = vadd.f32 %v1476, %v1489
        %v1492 = vadd.f32 %v1477, %v1489
        %v1493 = vadd.f32 %v1478, %v1489
        %v1494 = vadd.f32 %v1479, %v1489
        %v1495 = vadd.f32 %v1480, %v1489
        %v1496 = vadd.f32 %v1481, %v1489
        %v1497 = vadd.f32 %v1482, %v1489
        %v1498 = vadd.f32 %v1483, %v1489
        %v1499 = vmax.f32 %v1491, 0.0
        %v1500 = vmax.f32 %v1492, 0.0
        %v1501 = vmax.f32 %v1493, 0.0
        %v1502 = vmax.f32 %v1494, 0.0
        %v1503 = vmax.f32 %v1495, 0.0
        %v1504 = vmax.f32 %v1496, 0.0
        %v1505 = vmax.f32 %v1497, 0.0
        %v1506 = vmax.f32 %v1498, 0.0
        %v1507 = vpack.c.bf16 %v1500, %v1499
        %v1508 = vpack.c.bf16 %v1502, %v1501
        %v1509 = vpack.c.bf16 %v1504, %v1503
        %v1510 = vpack.c.bf16 %v1506, %v1505
        %v1511 = vld [vmem:[%s7] sm:$0x3]
        %v1512 = vld [vmem:[%s8] sm:$0x1]
        %v1514 = vlaneseq
        %v1515 = vshrl.u32 %v1514, 7
        %v1516 = vsub.s32 0, %v1515
        %v1517 = vrot.slane %v1512, %v1516
        %v1520 = vsel %vm631, %v1507, 0
        %v1523 = vsel %vm631, %v1508, 0
        %v1526 = vsel %vm631, %v1509, 0
        %v1529 = vsel %vm631, %v1510, 0
        %vm1531 = vcmask 1041408
        %v1533 = vsel %vm1531, %v1511, 0
        %1535 = vmatprep.subr.bf16.mxu0 0
        %1536 = vmatpush1.bf16.msra.mxu0 %v1533
        %1537 = vmatprep.subr.bf16.mxu0 0
        %1538 = vmatpush1.bf16.msra.mxu0 0
        %1539 = vmatprep.subr.bf16.mxu0 0
        %1540 = vmatpush1.bf16.msra.mxu0 0
        %1541 = vmatprep.subr.bf16.mxu0 0
        %1542 = vmatpush1.bf16.msra.mxu0 0
        %1543 = vmatprep.subr.bf16.mxu0 0
        %1544 = vmatpush1.bf16.msra.mxu0 0
        %1545 = vmatprep.subr.bf16.mxu0 0
        %1546 = vmatpush1.bf16.msra.mxu0 0
        %1547 = vmatprep.subr.bf16.mxu0 0
        %1548 = vmatpush1.bf16.msra.mxu0 0
        %1549 = vmatprep.subr.bf16.mxu0 0
        %1550 = vmatpush1.bf16.msra.mxu0 0
        %1551 = vmatprep.subr.bf16.mxu0 0
        %1552 = vmatpush1.bf16.msra.mxu0 0
        %1553 = vmatprep.subr.bf16.mxu0 0
        %1554 = vmatpush1.bf16.msra.mxu0 0
        %1555 = vmatprep.subr.bf16.mxu0 0
        %1556 = vmatpush1.bf16.msra.mxu0 0
        %1557 = vmatprep.subr.bf16.mxu0 0
        %1558 = vmatpush1.bf16.msra.mxu0 0
        %1559 = vmatprep.subr.bf16.mxu0 0
        %1560 = vmatpush1.bf16.msra.mxu0 0
        %1561 = vmatprep.subr.bf16.mxu0 0
        %1562 = vmatpush1.bf16.msra.mxu0 0
        %1563 = vmatprep.subr.bf16.mxu0 0
        %1564 = vmatpush1.bf16.msra.mxu0 0
        %1565 = vmatprep.subr.bf16.mxu0 0
        %1566 = vmatpush1.bf16.msra.mxu0 0
        %1567 = vmatprep.mubr.bf16.mxu0 0
        %1568 = vmatmul.mubr.bf16.gmra.mrb[0].mxu0 %v1520
        %v1569 = vpop.f32.mrb[0].mxu0
        %v1570 = vadd.f32 %v1517, %v1569
        %v1571 = vpop.f32.mrb[0].mxu0
        %v1572 = vpop.f32.mrb[0].mxu0
        %v1573 = vadd.f32 %v1517, %v1572
        %v1574 = vpop.f32.mrb[0].mxu0
        %1575 = vmatprep.mubr.bf16.mxu0 0
        %1576 = vmatmul.mubr.bf16.gmra.mrb[0].mxu0 %v1523
        %v1577 = vpop.f32.mrb[0].mxu0
        %v1578 = vadd.f32 %v1517, %v1577
        %v1579 = vpop.f32.mrb[0].mxu0
        %v1580 = vpop.f32.mrb[0].mxu0
        %v1581 = vadd.f32 %v1517, %v1580
        %v1582 = vpop.f32.mrb[0].mxu0
        %1583 = vmatprep.mubr.bf16.mxu0 0
        %1584 = vmatmul.mubr.bf16.gmra.mrb[0].mxu0 %v1526
        %v1585 = vpop.f32.mrb[0].mxu0
        %v1586 = vadd.f32 %v1517, %v1585
        %v1587 = vpop.f32.mrb[0].mxu0
        %v1588 = vpop.f32.mrb[0].mxu0
        %v1589 = vadd.f32 %v1517, %v1588
        %v1590 = vpop.f32.mrb[0].mxu0
        %1591 = vmatprep.mubr.bf16.mxu0 0
        %1592 = vmatmul.mubr.bf16.gmra.mrb[0].mxu0 %v1529
        %v1593 = vpop.f32.mrb[0].mxu0
        %v1594 = vadd.f32 %v1517, %v1593
        %v1595 = vpop.f32.mrb[0].mxu0
        %v1596 = vpop.f32.mrb[0].mxu0
        %v1597 = vadd.f32 %v1517, %v1596
        %v1598 = vpop.f32.mrb[0].mxu0
        %1599 = vdwg.mxu0
        %v1600 = vadd.f32 %v1570, %v352
        %v1601 = vadd.f32 %v1573, %v353
        %v1602 = vadd.f32 %v1578, %v354
        %v1603 = vadd.f32 %v1581, %v355
        %v1604 = vadd.f32 %v1586, %v356
        %v1605 = vadd.f32 %v1589, %v357
        %v1606 = vadd.f32 %v1594, %v358
        %v1607 = vadd.f32 %v1597, %v359
        %v1608 = vmax.f32 %v1600, 0.0
        %v1609 = vmax.f32 %v1601, 0.0
        %v1610 = vmax.f32 %v1602, 0.0
        %v1611 = vmax.f32 %v1603, 0.0
        %v1612 = vmax.f32 %v1604, 0.0
        %v1613 = vmax.f32 %v1605, 0.0
        %v1614 = vmax.f32 %v1606, 0.0
        %v1615 = vmax.f32 %v1607, 0.0
        %v1616 = vpack.c.bf16 %v1608, %v1608
        %v1617 = vpack.c.bf16 %v1609, %v1609
        %v1618 = vpack.c.bf16 %v1610, %v1610
        %v1619 = vpack.c.bf16 %v1611, %v1611
        %v1620 = vpack.c.bf16 %v1612, %v1612
        %v1621 = vpack.c.bf16 %v1613, %v1613
        %v1622 = vpack.c.bf16 %v1614, %v1614
        %v1623 = vpack.c.bf16 %v1615, %v1615
        %vm1624 = vcmask 125952
        %1625 = vst.msk [vmem:[%s350] sm:$0xf] %vm1624, %v1616
        %1626 = vst.msk [vmem:[%s350 + $0x4] sm:$0xf] %vm1624, %v1617
        %1627 = vst.msk [vmem:[%s350 + $0x8] sm:$0xf] %vm1624, %v1618
        %1628 = vst.msk [vmem:[%s350 + $0xc] sm:$0xf] %vm1624, %v1619
        %1629 = vst.msk [vmem:[%s350 + $0x10] sm:$0xf] %vm1624, %v1620
        %1630 = vst.msk [vmem:[%s350 + $0x14] sm:$0xf] %vm1624, %v1621
        %1631 = vst.msk [vmem:[%s350 + $0x18] sm:$0xf] %vm1624, %v1622
        %1632 = vst.msk [vmem:[%s350 + $0x1c] sm:$0xf] %vm1624, %v1623
        %s1633 = sand.u32 %s228, 1
        %s1634 = scalar_lea.sflag [#allocation4], %s1633
        %s1635 = sand.u32 %s228, 1
        %s1636 = smul.addr %s1635, 32
        %s1637 = scalar_lea.vmem [#allocation5], %s1636
        // Predicated region
        $region61: #{tpu_custom_call.1} parent=55 // pred_check
          %p1638 = pneg %p238
        $region62: #{tpu_custom_call.1} parent=55 // pred_check_branch
          %1640 = sbr.rel (%p1638) target = $region64
        $region63: #{tpu_custom_call.1} parent=55 // pred_region
          %s1642 = ssub.s32 512, 512
          %1643 = vsyncadd %s1634, %s1642
          %s1644 = smul.addr %s26, 8
          %s1645 = smul.addr %s1644, 64
          %s1646 = scalar_lea.hbm %s9, %s1645
          %s1647 = sshll.u32 %s1637, 4
          %s1648 = int_to_ptr.vmem [resolvable:$true] %s1647
          %1653 = dma.vmem_to_hbm [thread:$0]  %s1648, 512, %s1646, %s1634, 64, 64, 4
        $region64: #{tpu_custom_call.1} parent=55 // pred_fallthru
          _
      $region56: #{tpu_custom_call.1} parent=5 // pred_fallthru
        _
      %p1654 = scmp.le.s32.totalorder 2, %s21
      // Predicated region
      $region65: #{tpu_custom_call.1} parent=5 // pred_check
        %p1655 = pneg %p1654
      $region66: #{tpu_custom_call.1} parent=5 // pred_check_branch
        %1657 = sbr.rel (%p1655) target = $region68
      $region67: #{tpu_custom_call.1} parent=5 // pred_region
        %s1658 = ssub.s32 %s21, 2
        // Predicated region
        $region69: #{tpu_custom_call.1} parent=67 // pred_check
          %p1659 = pneg %p244
        $region70: #{tpu_custom_call.1} parent=67 // pred_check_branch
          %1661 = sbr.rel (%p1659) target = $region72
        $region71: #{tpu_custom_call.1} parent=67 // pred_region
          %s1662 = sand.u32 %s229, 1
          %s1663 = scalar_lea.sflag [#allocation4], %s1662
          %s1664 = sand.u32 %s229, 1
          %s1665 = smul.addr %s1664, 32
          %s1666 = scalar_lea.vmem [#allocation5], %s1665
          %1667 = dma.done %s1663, 512
        $region72: #{tpu_custom_call.1} parent=67 // pred_fallthru
          _
      $region68: #{tpu_custom_call.1} parent=5 // pred_fallthru
        _
    $region6: #{tpu_custom_call.1} parent=1 // loop_footer
      %s25 = sadd.s32 1, %s21
    $region7: #{tpu_custom_call.1} parent=1 // loop_footer_branch
      %20 = sbr.rel target = $region3
    $region8: #{tpu_custom_call.1} parent=1 // loop_exit
      _
    %1668 = vsyncpa [#allocation3], 1
    %s1669 = scalar_lea.sflag [#allocation3], 1
    %1670 = vsyncpa %s1669, 1
    %1671 = vsyncpa [#allocation4], 1
    %s1672 = scalar_lea.sflag [#allocation4], 1
    %1673 = vsyncpa %s1672, 1

</llo_original>
